<compile_context>
chip_gen: v7x
topology: tpu7x:2x2x1
jax: 0.10.0
libtpu: 0.0.40
codegen_flags: <defaults>
</compile_context>

<pallas_src>
import functools

import jax
import jax.numpy as jnp
from jax.experimental import pallas as pl
from jax.experimental.pallas import tpu as pltpu

N_BITS = 8
N_LEVELS = 2 ** N_BITS

# Per-grid-step element budgets (f32-equivalent elements).
_OUT_ELEM_BUDGET = 256 * 1024          # accumulator / output block (<= 1 MiB f32)
_IN_ELEM_BUDGET = 2 * 1024 * 1024      # A-tile + B-tile elements per step


def _generation_caps():
    """(tm_cap, tn_cap, tk_cap, vmem_limit_bytes) for the local TPU generation."""
    vmem_bytes = 64 * 1024 * 1024
    try:
        info = pltpu.get_tpu_info()
        vmem_bytes = int(getattr(info, "vmem_capacity_bytes", vmem_bytes))
    except Exception:
        pass
    if vmem_bytes >= 100 * 1024 * 1024:            # v5e / v6e: 128 MiB VMEM
        return 512, 512, 1024, 96 * 1024 * 1024
    return 512, 512, 512, 40 * 1024 * 1024         # v7x: 64 MiB physical VMEM


# ----------------------------------------------------------------------------
# Calibration (UniformQuantizer.init_quantization_scale, channel_wise=False).
# Pure init-time glue -- plain JAX.
# ----------------------------------------------------------------------------
def calibrate_uniform(x, n_bits=N_BITS):
    n_levels = 2 ** n_bits
    flat = x.reshape(-1).astype(jnp.float32)
    best_score = jnp.float32(jnp.inf)
    best_delta = jnp.float32(1.0)
    best_zp = jnp.float32(0.0)
    for pct in (0.999, 0.9999, 0.99999):
        new_max = jnp.quantile(flat, pct)
        new_min = jnp.quantile(flat, 1.0 - pct)
        delta = (new_max - new_min) / (n_levels - 1)
        delta = jnp.maximum(delta, jnp.float32(1e-8))  # guard constant inputs
        zp = jnp.round(-new_min / delta)
        x_q = jnp.clip(jnp.round(x / delta) + zp, 0.0, n_levels - 1)
        x_dq = (x_q - zp) * delta
        score = jnp.mean(jnp.abs(x - x_dq) ** 2.0)     # lp_loss(p=2, 'all')
        take = score < best_score
        best_delta = jnp.where(take, delta, best_delta)
        best_zp = jnp.where(take, zp, best_zp)
        best_score = jnp.where(take, score, best_score)
    return best_delta, best_zp


# ----------------------------------------------------------------------------
# One-pass pre-quantization (wrapper side, fused by XLA): centered bf16 codes.
# ----------------------------------------------------------------------------
def _fake_quant_codes(x, delta, zp):
    """fake-quant(x)/delta = clip(round(x/delta)+zp, 0, 255) - zp, as bf16.

    |code - zp| <= 255 for zp in [0, 255] so the codes are exact in bf16; the
    matmul kernel then runs the fast bf16 MXU path on exact integers and the
    combined scale delta_A*delta_B is applied once to the f32 accumulator.
    """
    inv = 1.0 / delta                    # reciprocal multiply; no divides
    hi = jnp.float32(N_LEVELS - 1)
    codes = jnp.clip(jnp.round(x.astype(jnp.float32) * inv) + zp, 0.0, hi) - zp
    return codes.astype(jnp.bfloat16)


# ----------------------------------------------------------------------------
# Pallas kernel: tiled batched matmul with resident f32 accumulator.
# Grid: (par0, par1, n_block, k_block) with K innermost ("arbitrary").
# ----------------------------------------------------------------------------
def _qmm_kernel(scale_ref, a_ref, b_ref, o_ref, acc_ref, *,
                use_quant, fold, bb, n_per_head):
    k = pl.program_id(3)

    @pl.when(k == 0)
    def _init():
        acc_ref[...] = jnp.zeros_like(acc_ref)

    acc_ref[...] += jnp.einsum(
        "bmk,bkn->bmn", a_ref[...], b_ref[...],
        preferred_element_type=jnp.float32)

    @pl.when(k == pl.num_programs(3) - 1)
    def _finalize():
        out = acc_ref[...]
        if use_quant:
            out = out * scale_ref[0]       # delta_A * delta_B applied once
        out = out.astype(o_ref.dtype)
        if fold:
            # Lane-dense store: head b's (tm, n) tile goes into lanes
            # [b*n, (b+1)*n) of the (tm, bb*n) output block.
            for b in range(bb):
                o_ref[0, :, b * n_per_head:(b + 1) * n_per_head] = out[b]
        else:
            o_ref[...] = out


# ----------------------------------------------------------------------------
# Wrapper: tiling / padding / pallas_call plumbing.
# ----------------------------------------------------------------------------
def _round_up(x, m):
    return ((x + m - 1) // m) * m


def _pad_axis(x, axis, new_size):
    pad = new_size - x.shape[axis]
    if pad <= 0:
        return x
    widths = [(0, 0)] * x.ndim
    widths[axis] = (0, pad)
    return jnp.pad(x, widths)


def _pick_tile(dim, cap):
    """(tile, padded extent): full dim when it fits, else the aligned cap."""
    if dim <= cap:
        return dim, dim
    return cap, _round_up(dim, cap)


def quant_matmul1(A, B, *, use_input_quant=False, quant_params=None,
                  compute_dtype=None):
    """Batched matmul A @ B with optional 8-bit fake quantization of inputs."""
    assert A.shape[:-2] == B.shape[:-2], "batch dims must match"
    assert A.shape[-1] == B.shape[-2], "contraction dims must match"
    batch_shape = A.shape[:-2]
    M, K = A.shape[-2:]
    _, N = B.shape[-2:]
    out_dtype = A.dtype

    A3 = A.reshape((-1, M, K))
    B3 = B.reshape((-1, K, N))
    nb = A3.shape[0]

    # ---- pre-quantize ONCE (outside the matmul grid); scale factored out ----
    if use_input_quant:
        da, za, db, zb = [jnp.asarray(p, jnp.float32) for p in quant_params]
        A3 = _fake_quant_codes(A3, da, za)
        B3 = _fake_quant_codes(B3, db, zb)
        scale = jnp.reshape(da * db, (1,))
    else:
        if compute_dtype is not None:          # optional bf16 dot passthrough
            A3 = A3.astype(compute_dtype)
            B3 = B3.astype(compute_dtype)
        scale = jnp.ones((1,), jnp.float32)

    tm_cap, tn_cap, tk_cap, vmem_limit = _generation_caps()
    tm, Mp = _pick_tile(M, tm_cap)
    tk, Kp = _pick_tile(K, tk_cap)

    # ---- lane-dense head folding for narrow N (head_dim < 128) ----
    fold_mode = N < 128
    if fold_mode:
        npad = next(d for d in (8, 16, 32, 64, 128) if d >= N)
        fold = 128 // npad                     # heads per 128 output lanes
        tn_eff = npad
        Np = npad
    else:
        tn_eff, Np = _pick_tile(N, tn_cap)
        npad, fold = N, 1

    # ---- heads per grid step (multiple of `fold`), under VMEM budgets ----
    bb = fold
    nb_cap = _round_up(nb, fold)
    while (2 * bb <= nb_cap
           and 2 * bb * tm * tn_eff <= _OUT_ELEM_BUDGET
           and 2 * bb * (tm * tk + tk * tn_eff) <= _IN_ELEM_BUDGET):
        bb *= 2
    nbp = _round_up(nb, bb)

    # ---- zero padding (after quantization: zero codes are exact zeros, so
    #      padded K / heads / rows contribute nothing or are sliced away) ----
    A3 = _pad_axis(_pad_axis(_pad_axis(A3, 2, Kp), 1, Mp), 0, nbp)
    B3 = _pad_axis(_pad_axis(_pad_axis(B3, 1, Kp), 2, Np), 0, nbp)

    grid_b = nbp // bb
    grid_m = Mp // tm
    grid_n = 1 if fold_mode else Np // tn_eff
    grid_k = Kp // tk

    a_block = (bb, tm, tk)
    b_block = (bb, tk, tn_eff)
    if fold_mode:
        out_shape = jax.ShapeDtypeStruct((grid_b, Mp, bb * npad), out_dtype)
        o_block = (1, tm, bb * npad)
    else:
        out_shape = jax.ShapeDtypeStruct((nbp, Mp, Np), out_dtype)
        o_block = (bb, tm, tn_eff)

    # Put the larger of (M-blocks, head-groups) first so a single-head large
    # matmul still spans both TensorCores on v7x (megacore sharding).
    if grid_m > grid_b:
        grid = (grid_m, grid_b, grid_n, grid_k)
        a_map = lambda i, b, j, k: (b, i, k)
        b_map = lambda i, b, j, k: (b, k, j)
        o_map = lambda i, b, j, k: (b, i, j)
    else:
        grid = (grid_b, grid_m, grid_n, grid_k)
        a_map = lambda b, i, j, k: (b, i, k)
        b_map = lambda b, i, j, k: (b, k, j)
        o_map = lambda b, i, j, k: (b, i, j)

    kernel = functools.partial(
        _qmm_kernel, use_quant=use_input_quant, fold=fold_mode,
        bb=bb, n_per_head=npad)

    out = pl.pallas_call(
        kernel,
        out_shape=out_shape,
        grid=grid,
        in_specs=[
            pl.BlockSpec(memory_space=pltpu.MemorySpace.SMEM),   # scale
            pl.BlockSpec(a_block, a_map),                        # A (codes)
            pl.BlockSpec(b_block, b_map),                        # B (codes)
        ],
        out_specs=pl.BlockSpec(o_block, o_map),
        scratch_shapes=[pltpu.VMEM((bb, tm, tn_eff), jnp.float32)],
        compiler_params=pltpu.CompilerParams(
            dimension_semantics=("parallel", "parallel", "parallel", "arbitrary"),
            vmem_limit_bytes=vmem_limit,
        ),
    )(scale, A3, B3)

    if fold_mode:
        # Un-fold heads from the lane axis: pure layout plumbing in the wrapper.
        out = out.reshape(grid_b, Mp, bb, npad)
        out = out.transpose(0, 2, 1, 3).reshape(grid_b * bb, Mp, npad)
    out = out[:nb, :M, :N]
    return out.reshape(batch_shape + (M, N))


# ----------------------------------------------------------------------------
# Thin module-like wrapper mirroring QuantMatMul1's state machine.
# ----------------------------------------------------------------------------
class QuantMatMul1:
    def __init__(self):
        self.use_input_quant = False
        self._calibrated = False
        self._params = None   # (delta_A, zp_A, delta_B, zp_B)

    def set_quant_state(self, input_quant=False, weight_quant=False):
        self.use_input_quant = input_quant

    def __call__(self, A, B):
        if self.use_input_quant:
            if not self._calibrated:
                # Calibrated once from the first quantized call (as in PyTorch);
                # later batches reuse these delta/zero_point values.
                da, za = calibrate_uniform(A)
                db, zb = calibrate_uniform(B)
                self._params = (da, za, db, zb)
                self._calibrated = True
            return quant_matmul1(A, B, use_input_quant=True,
                                 quant_params=self._params)
        return quant_matmul1(A, B, use_input_quant=False)


# ----------------------------------------------------------------------------
# Demo / smoke test.
# ----------------------------------------------------------------------------
if __name__ == "__main__":
    key = jax.random.PRNGKey(0)
    kA, kB, kC, kD = jax.random.split(key, 4)

    # Small attention-like shapes: (batch, heads, M, K) @ (batch, heads, K, N).
    batch, heads, M, K, N = 2, 4, 8, 32, 8
    A = jax.random.normal(kA, (batch, heads, M, K), dtype=jnp.float32)
    B = jax.random.normal(kB, (batch, heads, K, N), dtype=jnp.float32)

    mod = QuantMatMul1()

    # Path 1: default state (no input quant) -> plain A @ B (lane-folded heads).
    out_fp = jax.block_until_ready(mod(A, B))
    ref_fp = jnp.einsum("bhmk,bhkn->bhmn", A, B)
    assert jnp.allclose(out_fp, ref_fp, atol=1e-3, rtol=1e-3), "fp path mismatch"

    # Path 2: input quantization enabled (pre-quantized bf16 codes + bf16 MXU).
    mod.set_quant_state(input_quant=True)
    out_q = jax.block_until_ready(mod(A, B))

    da, za, db, zb = mod._params
    hi = float(N_LEVELS - 1)

    def fake_quant_ref(x, delta, zp):
        # Mirrors the kernel's reciprocal-multiply formulation (identical to
        # round(x/delta) except on exact .5 rounding ties).
        inv = 1.0 / delta
        return (jnp.clip(jnp.round(x * inv) + zp, 0.0, hi) - zp) * delta

    ref_q = jnp.einsum("bhmk,bhkn->bhmn",
                       fake_quant_ref(A, da, za), fake_quant_ref(B, db, zb))
    assert jnp.allclose(out_q, ref_q, atol=1e-3, rtol=1e-3), "quant path mismatch"

    # Path 3: a modestly larger single-head shape exercising the M/N/K tiling,
    # the resident K-axis accumulator and the non-folded (N >= 128) path.
    A2 = jax.random.normal(kC, (1, 1, 512, 1024), dtype=jnp.float32)
    B2 = jax.random.normal(kD, (1, 1, 1024, 256), dtype=jnp.float32)
    out2 = jax.block_until_ready(quant_matmul1(A2, B2, use_input_quant=False))
    ref2 = jnp.einsum("bhmk,bhkn->bhmn", A2, B2)
    assert jnp.allclose(out2, ref2, rtol=2e-2, atol=0.5), "tiled fp path mismatch"

    print("KERNEL_OK")
</pallas_src>

<mosaic_0001>
module attributes {stable_mosaic.version = 11 : i64} {
  func.func @_qmm_kernel(%arg0: i32, %arg1: i32, %arg2: i32, %arg3: i32, %arg4: memref<1xf32, #tpu.memory_space<smem>>, %arg5: memref<16x8x32xf32, #tpu.memory_space<vmem>>, %arg6: memref<16x32x8xf32, #tpu.memory_space<vmem>>, %arg7: memref<1x8x128xf32, #tpu.memory_space<vmem>>, %arg8: memref<16x8x8xf32, #tpu.memory_space<vmem>>) attributes {dimension_semantics = [#tpu.dimension_semantics<parallel>, #tpu.dimension_semantics<parallel>, #tpu.dimension_semantics<parallel>, #tpu.dimension_semantics<arbitrary>], iteration_bounds = array<i64: 1, 1, 1, 1>, scalar_prefetch = 0 : i64, scratch_operands = 1 : i64, tpu.core_type = #tpu.core_type<tc>, window_params = [{transform_indices = @transform_0, window_bounds = array<i64: 1>}, {transform_indices = @transform_1, window_bounds = array<i64: 16, 8, 32>}, {transform_indices = @transform_2, window_bounds = array<i64: 16, 32, 8>}, {transform_indices = @transform_3, window_bounds = array<i64: 1, 8, 128>}]} {
    %c0_i32 = arith.constant 0 : i32
    %0 = arith.cmpi eq, %arg3, %c0_i32 : i32
    %1 = arith.extui %0 : i1 to i32
    %c0_i32_0 = arith.constant 0 : i32
    %2 = arith.cmpi ne, %1, %c0_i32_0 : i32
    scf.if %2 {
      %cst_14 = arith.constant 0.000000e+00 : f32
      %12 = vector.broadcast %cst_14 : f32 to vector<16x8x8xf32>
      %c0_15 = arith.constant 0 : index
      %c0_16 = arith.constant 0 : index
      %c0_17 = arith.constant 0 : index
      %13 = vector.load %arg8[%c0_15, %c0_16, %c0_17] : memref<16x8x8xf32, #tpu.memory_space<vmem>>, vector<16x8x8xf32>
      tpu.vector_store %arg8[%c0_15, %c0_16, %c0_17], %12 {strides = array<i32>} : memref<16x8x8xf32, #tpu.memory_space<vmem>>, vector<16x8x8xf32>,
    } else {
    }
    %c0 = arith.constant 0 : index
    %c0_1 = arith.constant 0 : index
    %c0_2 = arith.constant 0 : index
    %3 = vector.load %arg8[%c0, %c0_1, %c0_2] : memref<16x8x8xf32, #tpu.memory_space<vmem>>, vector<16x8x8xf32>
    %c0_3 = arith.constant 0 : index
    %c0_4 = arith.constant 0 : index
    %c0_5 = arith.constant 0 : index
    %4 = vector.load %arg5[%c0_3, %c0_4, %c0_5] : memref<16x8x32xf32, #tpu.memory_space<vmem>>, vector<16x8x32xf32>
    %c0_6 = arith.constant 0 : index
    %c0_7 = arith.constant 0 : index
    %c0_8 = arith.constant 0 : index
    %5 = vector.load %arg6[%c0_6, %c0_7, %c0_8] : memref<16x32x8xf32, #tpu.memory_space<vmem>>, vector<16x32x8xf32>
    "tpu.trace_start"() <{level = 10 : i32, message = "bmk,bkn->bmn"}> : () -> ()
    %cst = arith.constant dense<0.000000e+00> : vector<16x8x8xf32>
    %6 = tpu.matmul %4, %5, %cst {dimension_numbers = #tpu.dot_dimension_numbers<[2], [1], [1], [2], [0, 0, 0, 1, 1, 2], [0], [0]>} : vector<16x8x32xf32>, vector<16x32x8xf32>, vector<16x8x8xf32> -> vector<16x8x8xf32>
    "tpu.trace_stop"() : () -> ()
    %7 = arith.addf %3, %6 : vector<16x8x8xf32>
    %c0_9 = arith.constant 0 : index
    %c0_10 = arith.constant 0 : index
    %c0_11 = arith.constant 0 : index
    %8 = vector.load %arg8[%c0_9, %c0_10, %c0_11] : memref<16x8x8xf32, #tpu.memory_space<vmem>>, vector<16x8x8xf32>
    tpu.vector_store %arg8[%c0_9, %c0_10, %c0_11], %7 {strides = array<i32>} : memref<16x8x8xf32, #tpu.memory_space<vmem>>, vector<16x8x8xf32>,
    %c0_i32_12 = arith.constant 0 : i32
    %9 = arith.cmpi eq, %arg3, %c0_i32_12 : i32
    %10 = arith.extui %9 : i1 to i32
    %c0_i32_13 = arith.constant 0 : i32
    %11 = arith.cmpi ne, %10, %c0_i32_13 : i32
    scf.if %11 {
      %c0_14 = arith.constant 0 : index
      %c0_15 = arith.constant 0 : index
      %c0_16 = arith.constant 0 : index
      %12 = vector.load %arg8[%c0_14, %c0_15, %c0_16] : memref<16x8x8xf32, #tpu.memory_space<vmem>>, vector<16x8x8xf32>
      %13 = vector.extract_strided_slice %12 {offsets = [0, 0, 0], sizes = [1, 8, 8], strides = [1, 1, 1]} : vector<16x8x8xf32> to vector<1x8x8xf32>
      %14 = vector.shape_cast %13 : vector<1x8x8xf32> to vector<8x8xf32>
      %c0_17 = arith.constant 0 : index
      %c0_18 = arith.constant 0 : index
      %c0_19 = arith.constant 0 : index
      %15 = vector.load %arg7[%c0_17, %c0_18, %c0_19] : memref<1x8x128xf32, #tpu.memory_space<vmem>>, vector<1x8x8xf32>
      %16 = vector.shape_cast %15 : vector<1x8x8xf32> to vector<8x8xf32>
      %17 = vector.shape_cast %14 : vector<8x8xf32> to vector<1x8x8xf32>
      tpu.vector_store %arg7[%c0_17, %c0_18, %c0_19], %17 {strides = array<i32>} : memref<1x8x128xf32, #tpu.memory_space<vmem>>, vector<1x8x8xf32>,
      %18 = vector.extract_strided_slice %12 {offsets = [1, 0, 0], sizes = [1, 8, 8], strides = [1, 1, 1]} : vector<16x8x8xf32> to vector<1x8x8xf32>
      %19 = vector.shape_cast %18 : vector<1x8x8xf32> to vector<8x8xf32>
      %c0_20 = arith.constant 0 : index
      %c0_21 = arith.constant 0 : index
      %c8 = arith.constant 8 : index
      %20 = vector.load %arg7[%c0_20, %c0_21, %c8] : memref<1x8x128xf32, #tpu.memory_space<vmem>>, vector<1x8x8xf32>
      %21 = vector.shape_cast %20 : vector<1x8x8xf32> to vector<8x8xf32>
      %22 = vector.shape_cast %19 : vector<8x8xf32> to vector<1x8x8xf32>
      tpu.vector_store %arg7[%c0_20, %c0_21, %c8], %22 {strides = array<i32>} : memref<1x8x128xf32, #tpu.memory_space<vmem>>, vector<1x8x8xf32>,
      %23 = vector.extract_strided_slice %12 {offsets = [2, 0, 0], sizes = [1, 8, 8], strides = [1, 1, 1]} : vector<16x8x8xf32> to vector<1x8x8xf32>
      %24 = vector.shape_cast %23 : vector<1x8x8xf32> to vector<8x8xf32>
      %c0_22 = arith.constant 0 : index
      %c0_23 = arith.constant 0 : index
      %c16 = arith.constant 16 : index
      %25 = vector.load %arg7[%c0_22, %c0_23, %c16] : memref<1x8x128xf32, #tpu.memory_space<vmem>>, vector<1x8x8xf32>
      %26 = vector.shape_cast %25 : vector<1x8x8xf32> to vector<8x8xf32>
      %27 = vector.shape_cast %24 : vector<8x8xf32> to vector<1x8x8xf32>
      tpu.vector_store %arg7[%c0_22, %c0_23, %c16], %27 {strides = array<i32>} : memref<1x8x128xf32, #tpu.memory_space<vmem>>, vector<1x8x8xf32>,
      %28 = vector.extract_strided_slice %12 {offsets = [3, 0, 0], sizes = [1, 8, 8], strides = [1, 1, 1]} : vector<16x8x8xf32> to vector<1x8x8xf32>
      %29 = vector.shape_cast %28 : vector<1x8x8xf32> to vector<8x8xf32>
      %c0_24 = arith.constant 0 : index
      %c0_25 = arith.constant 0 : index
      %c24 = arith.constant 24 : index
      %30 = vector.load %arg7[%c0_24, %c0_25, %c24] : memref<1x8x128xf32, #tpu.memory_space<vmem>>, vector<1x8x8xf32>
      %31 = vector.shape_cast %30 : vector<1x8x8xf32> to vector<8x8xf32>
      %32 = vector.shape_cast %29 : vector<8x8xf32> to vector<1x8x8xf32>
      tpu.vector_store %arg7[%c0_24, %c0_25, %c24], %32 {strides = array<i32>} : memref<1x8x128xf32, #tpu.memory_space<vmem>>, vector<1x8x8xf32>,
      %33 = vector.extract_strided_slice %12 {offsets = [4, 0, 0], sizes = [1, 8, 8], strides = [1, 1, 1]} : vector<16x8x8xf32> to vector<1x8x8xf32>
      %34 = vector.shape_cast %33 : vector<1x8x8xf32> to vector<8x8xf32>
      %c0_26 = arith.constant 0 : index
      %c0_27 = arith.constant 0 : index
      %c32 = arith.constant 32 : index
      %35 = vector.load %arg7[%c0_26, %c0_27, %c32] : memref<1x8x128xf32, #tpu.memory_space<vmem>>, vector<1x8x8xf32>
      %36 = vector.shape_cast %35 : vector<1x8x8xf32> to vector<8x8xf32>
      %37 = vector.shape_cast %34 : vector<8x8xf32> to vector<1x8x8xf32>
      tpu.vector_store %arg7[%c0_26, %c0_27, %c32], %37 {strides = array<i32>} : memref<1x8x128xf32, #tpu.memory_space<vmem>>, vector<1x8x8xf32>,
      %38 = vector.extract_strided_slice %12 {offsets = [5, 0, 0], sizes = [1, 8, 8], strides = [1, 1, 1]} : vector<16x8x8xf32> to vector<1x8x8xf32>
      %39 = vector.shape_cast %38 : vector<1x8x8xf32> to vector<8x8xf32>
      %c0_28 = arith.constant 0 : index
      %c0_29 = arith.constant 0 : index
      %c40 = arith.constant 40 : index
      %40 = vector.load %arg7[%c0_28, %c0_29, %c40] : memref<1x8x128xf32, #tpu.memory_space<vmem>>, vector<1x8x8xf32>
      %41 = vector.shape_cast %40 : vector<1x8x8xf32> to vector<8x8xf32>
      %42 = vector.shape_cast %39 : vector<8x8xf32> to vector<1x8x8xf32>
      tpu.vector_store %arg7[%c0_28, %c0_29, %c40], %42 {strides = array<i32>} : memref<1x8x128xf32, #tpu.memory_space<vmem>>, vector<1x8x8xf32>,
      %43 = vector.extract_strided_slice %12 {offsets = [6, 0, 0], sizes = [1, 8, 8], strides = [1, 1, 1]} : vector<16x8x8xf32> to vector<1x8x8xf32>
      %44 = vector.shape_cast %43 : vector<1x8x8xf32> to vector<8x8xf32>
      %c0_30 = arith.constant 0 : index
      %c0_31 = arith.constant 0 : index
      %c48 = arith.constant 48 : index
      %45 = vector.load %arg7[%c0_30, %c0_31, %c48] : memref<1x8x128xf32, #tpu.memory_space<vmem>>, vector<1x8x8xf32>
      %46 = vector.shape_cast %45 : vector<1x8x8xf32> to vector<8x8xf32>
      %47 = vector.shape_cast %44 : vector<8x8xf32> to vector<1x8x8xf32>
      tpu.vector_store %arg7[%c0_30, %c0_31, %c48], %47 {strides = array<i32>} : memref<1x8x128xf32, #tpu.memory_space<vmem>>, vector<1x8x8xf32>,
      %48 = vector.extract_strided_slice %12 {offsets = [7, 0, 0], sizes = [1, 8, 8], strides = [1, 1, 1]} : vector<16x8x8xf32> to vector<1x8x8xf32>
      %49 = vector.shape_cast %48 : vector<1x8x8xf32> to vector<8x8xf32>
      %c0_32 = arith.constant 0 : index
      %c0_33 = arith.constant 0 : index
      %c56 = arith.constant 56 : index
      %50 = vector.load %arg7[%c0_32, %c0_33, %c56] : memref<1x8x128xf32, #tpu.memory_space<vmem>>, vector<1x8x8xf32>
      %51 = vector.shape_cast %50 : vector<1x8x8xf32> to vector<8x8xf32>
      %52 = vector.shape_cast %49 : vector<8x8xf32> to vector<1x8x8xf32>
      tpu.vector_store %arg7[%c0_32, %c0_33, %c56], %52 {strides = array<i32>} : memref<1x8x128xf32, #tpu.memory_space<vmem>>, vector<1x8x8xf32>,
      %53 = vector.extract_strided_slice %12 {offsets = [8, 0, 0], sizes = [1, 8, 8], strides = [1, 1, 1]} : vector<16x8x8xf32> to vector<1x8x8xf32>
      %54 = vector.shape_cast %53 : vector<1x8x8xf32> to vector<8x8xf32>
      %c0_34 = arith.constant 0 : index
      %c0_35 = arith.constant 0 : index
      %c64 = arith.constant 64 : index
      %55 = vector.load %arg7[%c0_34, %c0_35, %c64] : memref<1x8x128xf32, #tpu.memory_space<vmem>>, vector<1x8x8xf32>
      %56 = vector.shape_cast %55 : vector<1x8x8xf32> to vector<8x8xf32>
      %57 = vector.shape_cast %54 : vector<8x8xf32> to vector<1x8x8xf32>
      tpu.vector_store %arg7[%c0_34, %c0_35, %c64], %57 {strides = array<i32>} : memref<1x8x128xf32, #tpu.memory_space<vmem>>, vector<1x8x8xf32>,
      %58 = vector.extract_strided_slice %12 {offsets = [9, 0, 0], sizes = [1, 8, 8], strides = [1, 1, 1]} : vector<16x8x8xf32> to vector<1x8x8xf32>
      %59 = vector.shape_cast %58 : vector<1x8x8xf32> to vector<8x8xf32>
      %c0_36 = arith.constant 0 : index
      %c0_37 = arith.constant 0 : index
      %c72 = arith.constant 72 : index
      %60 = vector.load %arg7[%c0_36, %c0_37, %c72] : memref<1x8x128xf32, #tpu.memory_space<vmem>>, vector<1x8x8xf32>
      %61 = vector.shape_cast %60 : vector<1x8x8xf32> to vector<8x8xf32>
      %62 = vector.shape_cast %59 : vector<8x8xf32> to vector<1x8x8xf32>
      tpu.vector_store %arg7[%c0_36, %c0_37, %c72], %62 {strides = array<i32>} : memref<1x8x128xf32, #tpu.memory_space<vmem>>, vector<1x8x8xf32>,
      %63 = vector.extract_strided_slice %12 {offsets = [10, 0, 0], sizes = [1, 8, 8], strides = [1, 1, 1]} : vector<16x8x8xf32> to vector<1x8x8xf32>
      %64 = vector.shape_cast %63 : vector<1x8x8xf32> to vector<8x8xf32>
      %c0_38 = arith.constant 0 : index
      %c0_39 = arith.constant 0 : index
      %c80 = arith.constant 80 : index
      %65 = vector.load %arg7[%c0_38, %c0_39, %c80] : memref<1x8x128xf32, #tpu.memory_space<vmem>>, vector<1x8x8xf32>
      %66 = vector.shape_cast %65 : vector<1x8x8xf32> to vector<8x8xf32>
      %67 = vector.shape_cast %64 : vector<8x8xf32> to vector<1x8x8xf32>
      tpu.vector_store %arg7[%c0_38, %c0_39, %c80], %67 {strides = array<i32>} : memref<1x8x128xf32, #tpu.memory_space<vmem>>, vector<1x8x8xf32>,
      %68 = vector.extract_strided_slice %12 {offsets = [11, 0, 0], sizes = [1, 8, 8], strides = [1, 1, 1]} : vector<16x8x8xf32> to vector<1x8x8xf32>
      %69 = vector.shape_cast %68 : vector<1x8x8xf32> to vector<8x8xf32>
      %c0_40 = arith.constant 0 : index
      %c0_41 = arith.constant 0 : index
      %c88 = arith.constant 88 : index
      %70 = vector.load %arg7[%c0_40, %c0_41, %c88] : memref<1x8x128xf32, #tpu.memory_space<vmem>>, vector<1x8x8xf32>
      %71 = vector.shape_cast %70 : vector<1x8x8xf32> to vector<8x8xf32>
      %72 = vector.shape_cast %69 : vector<8x8xf32> to vector<1x8x8xf32>
      tpu.vector_store %arg7[%c0_40, %c0_41, %c88], %72 {strides = array<i32>} : memref<1x8x128xf32, #tpu.memory_space<vmem>>, vector<1x8x8xf32>,
      %73 = vector.extract_strided_slice %12 {offsets = [12, 0, 0], sizes = [1, 8, 8], strides = [1, 1, 1]} : vector<16x8x8xf32> to vector<1x8x8xf32>
      %74 = vector.shape_cast %73 : vector<1x8x8xf32> to vector<8x8xf32>
      %c0_42 = arith.constant 0 : index
      %c0_43 = arith.constant 0 : index
      %c96 = arith.constant 96 : index
      %75 = vector.load %arg7[%c0_42, %c0_43, %c96] : memref<1x8x128xf32, #tpu.memory_space<vmem>>, vector<1x8x8xf32>
      %76 = vector.shape_cast %75 : vector<1x8x8xf32> to vector<8x8xf32>
      %77 = vector.shape_cast %74 : vector<8x8xf32> to vector<1x8x8xf32>
      tpu.vector_store %arg7[%c0_42, %c0_43, %c96], %77 {strides = array<i32>} : memref<1x8x128xf32, #tpu.memory_space<vmem>>, vector<1x8x8xf32>,
      %78 = vector.extract_strided_slice %12 {offsets = [13, 0, 0], sizes = [1, 8, 8], strides = [1, 1, 1]} : vector<16x8x8xf32> to vector<1x8x8xf32>
      %79 = vector.shape_cast %78 : vector<1x8x8xf32> to vector<8x8xf32>
      %c0_44 = arith.constant 0 : index
      %c0_45 = arith.constant 0 : index
      %c104 = arith.constant 104 : index
      %80 = vector.load %arg7[%c0_44, %c0_45, %c104] : memref<1x8x128xf32, #tpu.memory_space<vmem>>, vector<1x8x8xf32>
      %81 = vector.shape_cast %80 : vector<1x8x8xf32> to vector<8x8xf32>
      %82 = vector.shape_cast %79 : vector<8x8xf32> to vector<1x8x8xf32>
      tpu.vector_store %arg7[%c0_44, %c0_45, %c104], %82 {strides = array<i32>} : memref<1x8x128xf32, #tpu.memory_space<vmem>>, vector<1x8x8xf32>,
      %83 = vector.extract_strided_slice %12 {offsets = [14, 0, 0], sizes = [1, 8, 8], strides = [1, 1, 1]} : vector<16x8x8xf32> to vector<1x8x8xf32>
      %84 = vector.shape_cast %83 : vector<1x8x8xf32> to vector<8x8xf32>
      %c0_46 = arith.constant 0 : index
      %c0_47 = arith.constant 0 : index
      %c112 = arith.constant 112 : index
      %85 = vector.load %arg7[%c0_46, %c0_47, %c112] : memref<1x8x128xf32, #tpu.memory_space<vmem>>, vector<1x8x8xf32>
      %86 = vector.shape_cast %85 : vector<1x8x8xf32> to vector<8x8xf32>
      %87 = vector.shape_cast %84 : vector<8x8xf32> to vector<1x8x8xf32>
      tpu.vector_store %arg7[%c0_46, %c0_47, %c112], %87 {strides = array<i32>} : memref<1x8x128xf32, #tpu.memory_space<vmem>>, vector<1x8x8xf32>,
      %88 = vector.extract_strided_slice %12 {offsets = [15, 0, 0], sizes = [1, 8, 8], strides = [1, 1, 1]} : vector<16x8x8xf32> to vector<1x8x8xf32>
      %89 = vector.shape_cast %88 : vector<1x8x8xf32> to vector<8x8xf32>
      %c0_48 = arith.constant 0 : index
      %c0_49 = arith.constant 0 : index
      %c120 = arith.constant 120 : index
      %90 = vector.load %arg7[%c0_48, %c0_49, %c120] : memref<1x8x128xf32, #tpu.memory_space<vmem>>, vector<1x8x8xf32>
      %91 = vector.shape_cast %90 : vector<1x8x8xf32> to vector<8x8xf32>
      %92 = vector.shape_cast %89 : vector<8x8xf32> to vector<1x8x8xf32>
      tpu.vector_store %arg7[%c0_48, %c0_49, %c120], %92 {strides = array<i32>} : memref<1x8x128xf32, #tpu.memory_space<vmem>>, vector<1x8x8xf32>,
    } else {
    }
    return
  }
  func.func @transform_0(%arg0: i32, %arg1: i32, %arg2: i32, %arg3: i32) -> i32 {
    %c0_i32 = arith.constant 0 : i32
    %c0_i32_0 = arith.constant 0 : i32
    return %c0_i32 : i32
  }
  func.func @transform_1(%arg0: i32, %arg1: i32, %arg2: i32, %arg3: i32) -> (i32, i32, i32) {
    %c0_i32 = arith.constant 0 : i32
    return %arg0, %arg1, %arg3 : i32, i32, i32
  }
  func.func @transform_2(%arg0: i32, %arg1: i32, %arg2: i32, %arg3: i32) -> (i32, i32, i32) {
    %c0_i32 = arith.constant 0 : i32
    return %arg0, %arg3, %arg2 : i32, i32, i32
  }
  func.func @transform_3(%arg0: i32, %arg1: i32, %arg2: i32, %arg3: i32) -> (i32, i32, i32) {
    %c0_i32 = arith.constant 0 : i32
    return %arg0, %arg1, %arg2 : i32, i32, i32
  }
}

</mosaic_0001>

<llo_original>
// kernel: tpu_custom_call.1
$region0: #{tpu_custom_call.1}
  #allocation0 [shape = 'u32[]', space=smem, size = 0x4, offset = 0x4, fixed_abs, tag = 'smem constant byte address 0x4 - core index']
  #allocation1 [shape = 'u32[144,128]{1,0:T(1,128)}', space=vmem, size = 0x12000, scoped, tag = 'internal scratch']
  #allocation2 [shape = 'f32[16,8,8]{2,1,0:T(8,128)}', space=vmem, size = 0x10000, scoped, tag = 'scratch operand']
  #allocation3 [shape = 'f32[1]{0:T(128)S(6)}', space=smem, size = 0x200, scoped, tag = 'scoped memory for tpu_custom_call.1']
  %s0 = inlined_call_operand.<no memory space> [shape: f32[1], index: 0, kind: input, shape index: {}]
  %s1 = inlined_call_operand.vmem [shape: f32[16,8,32], index: 1, kind: input, shape index: {}]
  %s2 = inlined_call_operand.vmem [shape: f32[16,32,8], index: 2, kind: input, shape index: {}]
  %s3 = inlined_call_operand.hbm [shape: f32[1,8,128], index: 3, kind: output, shape index: {}]
  %s4 = sld [smem:[#allocation0]]
  $region30: #{tpu_custom_call.1} parent=0
    _
  %s6 = ssub.s32 1, %s4
  %s7 = scalar_select 0, %s6, %s4
  %8 = sst [smem:[#allocation3]] %s0
  $region1: #{tpu_custom_call.1} parent=0
    #allocation4 [shape = 'u8[4096]{0}', space=vmem, size = 0x1000, scoped, tag = 'output window, operand 0, single buffered']
    #allocation5 [shape = 's32[1]{0}', space=sflag, size = 0x4, scoped, tag = 'scoped memory for tpu_custom_call.1']
    %9 = vsyncpa [#allocation5], 0
    // Predicated region
    $region2: #{tpu_custom_call.1} parent=1 // pred_check
      _
    $region3: #{tpu_custom_call.1} parent=1 // pred_check_branch
      %11 = sbr.rel (0) target = $region5
    $region4: #{tpu_custom_call.1} parent=1 // pred_region
      _
    $region5: #{tpu_custom_call.1} parent=1 // pred_fallthru
      _
    // Predicated region
    $region6: #{tpu_custom_call.1} parent=1 // pred_check
      _
    $region7: #{tpu_custom_call.1} parent=1 // pred_check_branch
      %13 = sbr.rel (0) target = $region9
    $region8: #{tpu_custom_call.1} parent=1 // pred_region
      _
    $region9: #{tpu_custom_call.1} parent=1 // pred_fallthru
      _
    // Predicated region
    $region10: #{tpu_custom_call.1} parent=1 // pred_check
      _
    $region11: #{tpu_custom_call.1} parent=1 // pred_check_branch
      %15 = sbr.rel (0) target = $region13
    $region12: #{tpu_custom_call.1} parent=1 // pred_region
      _
    $region13: #{tpu_custom_call.1} parent=1 // pred_fallthru
      _
    %p16 = scmp.eq.s32.totalorder 0, 0
    // Predicated region
    $region14: #{tpu_custom_call.1} parent=1 // pred_check
      %p17 = pneg %p16
    $region15: #{tpu_custom_call.1} parent=1 // pred_check_branch
      %19 = sbr.rel (%p17) target = $region17
    $region16: #{tpu_custom_call.1} parent=1 // pred_region
      %vm20 = vcmask 64512
      %21 = vst.msk [vmem:[#allocation2] sm:$0xff] %vm20, 0.0
      %22 = vst.msk [vmem:[#allocation2 + $0x8] sm:$0xff] %vm20, 0.0
      %23 = vst.msk [vmem:[#allocation2 + $0x10] sm:$0xff] %vm20, 0.0
      %24 = vst.msk [vmem:[#allocation2 + $0x18] sm:$0xff] %vm20, 0.0
      %25 = vst.msk [vmem:[#allocation2 + $0x20] sm:$0xff] %vm20, 0.0
      %26 = vst.msk [vmem:[#allocation2 + $0x28] sm:$0xff] %vm20, 0.0
      %27 = vst.msk [vmem:[#allocation2 + $0x30] sm:$0xff] %vm20, 0.0
      %28 = vst.msk [vmem:[#allocation2 + $0x38] sm:$0xff] %vm20, 0.0
      %29 = vst.msk [vmem:[#allocation2 + $0x40] sm:$0xff] %vm20, 0.0
      %30 = vst.msk [vmem:[#allocation2 + $0x48] sm:$0xff] %vm20, 0.0
      %31 = vst.msk [vmem:[#allocation2 + $0x50] sm:$0xff] %vm20, 0.0
      %32 = vst.msk [vmem:[#allocation2 + $0x58] sm:$0xff] %vm20, 0.0
      %33 = vst.msk [vmem:[#allocation2 + $0x60] sm:$0xff] %vm20, 0.0
      %34 = vst.msk [vmem:[#allocation2 + $0x68] sm:$0xff] %vm20, 0.0
      %35 = vst.msk [vmem:[#allocation2 + $0x70] sm:$0xff] %vm20, 0.0
      %36 = vst.msk [vmem:[#allocation2 + $0x78] sm:$0xff] %vm20, 0.0
    $region17: #{tpu_custom_call.1} parent=1 // pred_fallthru
      _
    %v37 = vld [vmem:[#allocation2] sm:$0xff]
    %v38 = vld [vmem:[#allocation2 + $0x8] sm:$0xff]
    %v39 = vld [vmem:[#allocation2 + $0x10] sm:$0xff]
    %v40 = vld [vmem:[#allocation2 + $0x18] sm:$0xff]
    %v41 = vld [vmem:[#allocation2 + $0x20] sm:$0xff]
    %v42 = vld [vmem:[#allocation2 + $0x28] sm:$0xff]
    %v43 = vld [vmem:[#allocation2 + $0x30] sm:$0xff]
    %v44 = vld [vmem:[#allocation2 + $0x38] sm:$0xff]
    %v45 = vld [vmem:[#allocation2 + $0x40] sm:$0xff]
    %v46 = vld [vmem:[#allocation2 + $0x48] sm:$0xff]
    %v47 = vld [vmem:[#allocation2 + $0x50] sm:$0xff]
    %v48 = vld [vmem:[#allocation2 + $0x58] sm:$0xff]
    %v49 = vld [vmem:[#allocation2 + $0x60] sm:$0xff]
    %v50 = vld [vmem:[#allocation2 + $0x68] sm:$0xff]
    %v51 = vld [vmem:[#allocation2 + $0x70] sm:$0xff]
    %v52 = vld [vmem:[#allocation2 + $0x78] sm:$0xff]
    %v53 = vld [vmem:[%s1] sm:$0xff]
    %v54 = vld [vmem:[%s1 + $0x8] sm:$0xff]
    %v55 = vld [vmem:[%s1 + $0x10] sm:$0xff]
    %v56 = vld [vmem:[%s1 + $0x18] sm:$0xff]
    %v57 = vld [vmem:[%s1 + $0x20] sm:$0xff]
    %v58 = vld [vmem:[%s1 + $0x28] sm:$0xff]
    %v59 = vld [vmem:[%s1 + $0x30] sm:$0xff]
    %v60 = vld [vmem:[%s1 + $0x38] sm:$0xff]
    %v61 = vld [vmem:[%s1 + $0x40] sm:$0xff]
    %v62 = vld [vmem:[%s1 + $0x48] sm:$0xff]
    %v63 = vld [vmem:[%s1 + $0x50] sm:$0xff]
    %v64 = vld [vmem:[%s1 + $0x58] sm:$0xff]
    %v65 = vld [vmem:[%s1 + $0x60] sm:$0xff]
    %v66 = vld [vmem:[%s1 + $0x68] sm:$0xff]
    %v67 = vld [vmem:[%s1 + $0x70] sm:$0xff]
    %v68 = vld [vmem:[%s1 + $0x78] sm:$0xff]
    %v69 = vld [vmem:[%s2] sm:$0xff]
    %v70 = vld [vmem:[%s2 + $0x8] sm:$0xff]
    %v71 = vld [vmem:[%s2 + $0x10] sm:$0xff]
    %v72 = vld [vmem:[%s2 + $0x18] sm:$0xff]
    %v73 = vld [vmem:[%s2 + $0x20] sm:$0xff]
    %v74 = vld [vmem:[%s2 + $0x28] sm:$0xff]
    %v75 = vld [vmem:[%s2 + $0x30] sm:$0xff]
    %v76 = vld [vmem:[%s2 + $0x38] sm:$0xff]
    %v77 = vld [vmem:[%s2 + $0x40] sm:$0xff]
    %v78 = vld [vmem:[%s2 + $0x48] sm:$0xff]
    %v79 = vld [vmem:[%s2 + $0x50] sm:$0xff]
    %v80 = vld [vmem:[%s2 + $0x58] sm:$0xff]
    %v81 = vld [vmem:[%s2 + $0x60] sm:$0xff]
    %v82 = vld [vmem:[%s2 + $0x68] sm:$0xff]
    %v83 = vld [vmem:[%s2 + $0x70] sm:$0xff]
    %v84 = vld [vmem:[%s2 + $0x78] sm:$0xff]
    %v85 = vld [vmem:[%s2 + $0x80] sm:$0xff]
    %v86 = vld [vmem:[%s2 + $0x88] sm:$0xff]
    %v87 = vld [vmem:[%s2 + $0x90] sm:$0xff]
    %v88 = vld [vmem:[%s2 + $0x98] sm:$0xff]
    %v89 = vld [vmem:[%s2 + $0xa0] sm:$0xff]
    %v90 = vld [vmem:[%s2 + $0xa8] sm:$0xff]
    %v91 = vld [vmem:[%s2 + $0xb0] sm:$0xff]
    %v92 = vld [vmem:[%s2 + $0xb8] sm:$0xff]
    %v93 = vld [vmem:[%s2 + $0xc0] sm:$0xff]
    %v94 = vld [vmem:[%s2 + $0xc8] sm:$0xff]
    %v95 = vld [vmem:[%s2 + $0xd0] sm:$0xff]
    %v96 = vld [vmem:[%s2 + $0xd8] sm:$0xff]
    %v97 = vld [vmem:[%s2 + $0xe0] sm:$0xff]
    %v98 = vld [vmem:[%s2 + $0xe8] sm:$0xff]
    %v99 = vld [vmem:[%s2 + $0xf0] sm:$0xff]
    %v100 = vld [vmem:[%s2 + $0xf8] sm:$0xff]
    %v101 = vld [vmem:[%s2 + $0x100] sm:$0xff]
    %v102 = vld [vmem:[%s2 + $0x108] sm:$0xff]
    %v103 = vld [vmem:[%s2 + $0x110] sm:$0xff]
    %v104 = vld [vmem:[%s2 + $0x118] sm:$0xff]
    %v105 = vld [vmem:[%s2 + $0x120] sm:$0xff]
    %v106 = vld [vmem:[%s2 + $0x128] sm:$0xff]
    %v107 = vld [vmem:[%s2 + $0x130] sm:$0xff]
    %v108 = vld [vmem:[%s2 + $0x138] sm:$0xff]
    %v109 = vld [vmem:[%s2 + $0x140] sm:$0xff]
    %v110 = vld [vmem:[%s2 + $0x148] sm:$0xff]
    %v111 = vld [vmem:[%s2 + $0x150] sm:$0xff]
    %v112 = vld [vmem:[%s2 + $0x158] sm:$0xff]
    %v113 = vld [vmem:[%s2 + $0x160] sm:$0xff]
    %v114 = vld [vmem:[%s2 + $0x168] sm:$0xff]
    %v115 = vld [vmem:[%s2 + $0x170] sm:$0xff]
    %v116 = vld [vmem:[%s2 + $0x178] sm:$0xff]
    %v117 = vld [vmem:[%s2 + $0x180] sm:$0xff]
    %v118 = vld [vmem:[%s2 + $0x188] sm:$0xff]
    %v119 = vld [vmem:[%s2 + $0x190] sm:$0xff]
    %v120 = vld [vmem:[%s2 + $0x198] sm:$0xff]
    %v121 = vld [vmem:[%s2 + $0x1a0] sm:$0xff]
    %v122 = vld [vmem:[%s2 + $0x1a8] sm:$0xff]
    %v123 = vld [vmem:[%s2 + $0x1b0] sm:$0xff]
    %v124 = vld [vmem:[%s2 + $0x1b8] sm:$0xff]
    %v125 = vld [vmem:[%s2 + $0x1c0] sm:$0xff]
    %v126 = vld [vmem:[%s2 + $0x1c8] sm:$0xff]
    %v127 = vld [vmem:[%s2 + $0x1d0] sm:$0xff]
    %v128 = vld [vmem:[%s2 + $0x1d8] sm:$0xff]
    %v129 = vld [vmem:[%s2 + $0x1e0] sm:$0xff]
    %v130 = vld [vmem:[%s2 + $0x1e8] sm:$0xff]
    %v131 = vld [vmem:[%s2 + $0x1f0] sm:$0xff]
    %v132 = vld [vmem:[%s2 + $0x1f8] sm:$0xff]
    %vm133 = vcmask 261120
    %v135 = vsel %vm133, %v53, 0
    %137 = vmatprep.subr.mxu0 0.0
    %138 = vmatpush1.msra.mxu0 %v69
    %139 = vmatprep.subr.mxu0 0.0
    %140 = vmatpush1.msra.mxu0 %v70
    %141 = vmatprep.subr.mxu0 0.0
    %142 = vmatpush1.msra.mxu0 %v71
    %143 = vmatprep.subr.mxu0 0.0
    %144 = vmatpush1.msra.mxu0 %v72
    %145 = vmatprep.subr.mxu0 0.0
    %146 = vmatpush1.msra.mxu0 0.0
    %147 = vmatprep.subr.mxu0 0.0
    %148 = vmatpush1.msra.mxu0 0.0
    %149 = vmatprep.subr.mxu0 0.0
    %150 = vmatpush1.msra.mxu0 0.0
    %151 = vmatprep.subr.mxu0 0.0
    %152 = vmatpush1.msra.mxu0 0.0
    %153 = vmatprep.subr.mxu0 0.0
    %154 = vmatpush1.msra.mxu0 0.0
    %155 = vmatprep.subr.mxu0 0.0
    %156 = vmatpush1.msra.mxu0 0.0
    %157 = vmatprep.subr.mxu0 0.0
    %158 = vmatpush1.msra.mxu0 0.0
    %159 = vmatprep.subr.mxu0 0.0
    %160 = vmatpush1.msra.mxu0 0.0
    %161 = vmatprep.subr.mxu0 0.0
    %162 = vmatpush1.msra.mxu0 0.0
    %163 = vmatprep.subr.mxu0 0.0
    %164 = vmatpush1.msra.mxu0 0.0
    %165 = vmatprep.subr.mxu0 0.0
    %166 = vmatpush1.msra.mxu0 0.0
    %167 = vmatprep.subr.mxu0 0.0
    %168 = vmatpush1.msra.mxu0 0.0
    %169 = vmatprep.subr.mxu0 0.0
    %170 = vmatpush1.msra.mxu0 0.0
    %171 = vmatprep.subr.mxu0 0.0
    %172 = vmatpush1.msra.mxu0 0.0
    %173 = vmatprep.subr.mxu0 0.0
    %174 = vmatpush1.msra.mxu0 0.0
    %175 = vmatprep.subr.mxu0 0.0
    %176 = vmatpush1.msra.mxu0 0.0
    %177 = vmatprep.subr.mxu0 0.0
    %178 = vmatpush1.msra.mxu0 0.0
    %179 = vmatprep.subr.mxu0 0.0
    %180 = vmatpush1.msra.mxu0 0.0
    %181 = vmatprep.subr.mxu0 0.0
    %182 = vmatpush1.msra.mxu0 0.0
    %183 = vmatprep.subr.mxu0 0.0
    %184 = vmatpush1.msra.mxu0 0.0
    %185 = vmatprep.subr.mxu0 0.0
    %186 = vmatpush1.msra.mxu0 0.0
    %187 = vmatprep.subr.mxu0 0.0
    %188 = vmatpush1.msra.mxu0 0.0
    %189 = vmatprep.subr.mxu0 0.0
    %190 = vmatpush1.msra.mxu0 0.0
    %191 = vmatprep.subr.mxu0 0.0
    %192 = vmatpush1.msra.mxu0 0.0
    %193 = vmatprep.subr.mxu0 0.0
    %194 = vmatpush1.msra.mxu0 0.0
    %195 = vmatprep.subr.mxu0 0.0
    %196 = vmatpush1.msra.mxu0 0.0
    %197 = vmatprep.subr.mxu0 0.0
    %198 = vmatpush1.msra.mxu0 0.0
    %199 = vmatprep.subr.mxu0 0.0
    %200 = vmatpush1.msra.mxu0 0.0
    %201 = vmatprep.mubr.f32.mxu0 0.0
    %202 = vmatmul.mubr.f32.gmra.mrb[0].mxu0 %v135
    %v203 = vpop.f32.mrb[0].mxu0
    %v204 = vadd.f32 0.0, %v203
    %v205 = vpop.f32.mrb[0].mxu0
    %206 = vdwg.mxu0
    %v208 = vsel %vm133, %v54, 0
    %210 = vmatprep.subr.mxu0 0.0
    %211 = vmatpush1.msra.mxu0 %v73
    %212 = vmatprep.subr.mxu0 0.0
    %213 = vmatpush1.msra.mxu0 %v74
    %214 = vmatprep.subr.mxu0 0.0
    %215 = vmatpush1.msra.mxu0 %v75
    %216 = vmatprep.subr.mxu0 0.0
    %217 = vmatpush1.msra.mxu0 %v76
    %218 = vmatprep.subr.mxu0 0.0
    %219 = vmatpush1.msra.mxu0 0.0
    %220 = vmatprep.subr.mxu0 0.0
    %221 = vmatpush1.msra.mxu0 0.0
    %222 = vmatprep.subr.mxu0 0.0
    %223 = vmatpush1.msra.mxu0 0.0
    %224 = vmatprep.subr.mxu0 0.0
    %225 = vmatpush1.msra.mxu0 0.0
    %226 = vmatprep.subr.mxu0 0.0
    %227 = vmatpush1.msra.mxu0 0.0
    %228 = vmatprep.subr.mxu0 0.0
    %229 = vmatpush1.msra.mxu0 0.0
    %230 = vmatprep.subr.mxu0 0.0
    %231 = vmatpush1.msra.mxu0 0.0
    %232 = vmatprep.subr.mxu0 0.0
    %233 = vmatpush1.msra.mxu0 0.0
    %234 = vmatprep.subr.mxu0 0.0
    %235 = vmatpush1.msra.mxu0 0.0
    %236 = vmatprep.subr.mxu0 0.0
    %237 = vmatpush1.msra.mxu0 0.0
    %238 = vmatprep.subr.mxu0 0.0
    %239 = vmatpush1.msra.mxu0 0.0
    %240 = vmatprep.subr.mxu0 0.0
    %241 = vmatpush1.msra.mxu0 0.0
    %242 = vmatprep.subr.mxu0 0.0
    %243 = vmatpush1.msra.mxu0 0.0
    %244 = vmatprep.subr.mxu0 0.0
    %245 = vmatpush1.msra.mxu0 0.0
    %246 = vmatprep.subr.mxu0 0.0
    %247 = vmatpush1.msra.mxu0 0.0
    %248 = vmatprep.subr.mxu0 0.0
    %249 = vmatpush1.msra.mxu0 0.0
    %250 = vmatprep.subr.mxu0 0.0
    %251 = vmatpush1.msra.mxu0 0.0
    %252 = vmatprep.subr.mxu0 0.0
    %253 = vmatpush1.msra.mxu0 0.0
    %254 = vmatprep.subr.mxu0 0.0
    %255 = vmatpush1.msra.mxu0 0.0
    %256 = vmatprep.subr.mxu0 0.0
    %257 = vmatpush1.msra.mxu0 0.0
    %258 = vmatprep.subr.mxu0 0.0
    %259 = vmatpush1.msra.mxu0 0.0
    %260 = vmatprep.subr.mxu0 0.0
    %261 = vmatpush1.msra.mxu0 0.0
    %262 = vmatprep.subr.mxu0 0.0
    %263 = vmatpush1.msra.mxu0 0.0
    %264 = vmatprep.subr.mxu0 0.0
    %265 = vmatpush1.msra.mxu0 0.0
    %266 = vmatprep.subr.mxu0 0.0
    %267 = vmatpush1.msra.mxu0 0.0
    %268 = vmatprep.subr.mxu0 0.0
    %269 = vmatpush1.msra.mxu0 0.0
    %270 = vmatprep.subr.mxu0 0.0
    %271 = vmatpush1.msra.mxu0 0.0
    %272 = vmatprep.subr.mxu0 0.0
    %273 = vmatpush1.msra.mxu0 0.0
    %274 = vmatprep.mubr.f32.mxu0 0.0
    %275 = vmatmul.mubr.f32.gmra.mrb[0].mxu0 %v208
    %v276 = vpop.f32.mrb[0].mxu0
    %v277 = vadd.f32 0.0, %v276
    %v278 = vpop.f32.mrb[0].mxu0
    %279 = vdwg.mxu0
    %v281 = vsel %vm133, %v55, 0
    %283 = vmatprep.subr.mxu0 0.0
    %284 = vmatpush1.msra.mxu0 %v77
    %285 = vmatprep.subr.mxu0 0.0
    %286 = vmatpush1.msra.mxu0 %v78
    %287 = vmatprep.subr.mxu0 0.0
    %288 = vmatpush1.msra.mxu0 %v79
    %289 = vmatprep.subr.mxu0 0.0
    %290 = vmatpush1.msra.mxu0 %v80
    %291 = vmatprep.subr.mxu0 0.0
    %292 = vmatpush1.msra.mxu0 0.0
    %293 = vmatprep.subr.mxu0 0.0
    %294 = vmatpush1.msra.mxu0 0.0
    %295 = vmatprep.subr.mxu0 0.0
    %296 = vmatpush1.msra.mxu0 0.0
    %297 = vmatprep.subr.mxu0 0.0
    %298 = vmatpush1.msra.mxu0 0.0
    %299 = vmatprep.subr.mxu0 0.0
    %300 = vmatpush1.msra.mxu0 0.0
    %301 = vmatprep.subr.mxu0 0.0
    %302 = vmatpush1.msra.mxu0 0.0
    %303 = vmatprep.subr.mxu0 0.0
    %304 = vmatpush1.msra.mxu0 0.0
    %305 = vmatprep.subr.mxu0 0.0
    %306 = vmatpush1.msra.mxu0 0.0
    %307 = vmatprep.subr.mxu0 0.0
    %308 = vmatpush1.msra.mxu0 0.0
    %309 = vmatprep.subr.mxu0 0.0
    %310 = vmatpush1.msra.mxu0 0.0
    %311 = vmatprep.subr.mxu0 0.0
    %312 = vmatpush1.msra.mxu0 0.0
    %313 = vmatprep.subr.mxu0 0.0
    %314 = vmatpush1.msra.mxu0 0.0
    %315 = vmatprep.subr.mxu0 0.0
    %316 = vmatpush1.msra.mxu0 0.0
    %317 = vmatprep.subr.mxu0 0.0
    %318 = vmatpush1.msra.mxu0 0.0
    %319 = vmatprep.subr.mxu0 0.0
    %320 = vmatpush1.msra.mxu0 0.0
    %321 = vmatprep.subr.mxu0 0.0
    %322 = vmatpush1.msra.mxu0 0.0
    %323 = vmatprep.subr.mxu0 0.0
    %324 = vmatpush1.msra.mxu0 0.0
    %325 = vmatprep.subr.mxu0 0.0
    %326 = vmatpush1.msra.mxu0 0.0
    %327 = vmatprep.subr.mxu0 0.0
    %328 = vmatpush1.msra.mxu0 0.0
    %329 = vmatprep.subr.mxu0 0.0
    %330 = vmatpush1.msra.mxu0 0.0
    %331 = vmatprep.subr.mxu0 0.0
    %332 = vmatpush1.msra.mxu0 0.0
    %333 = vmatprep.subr.mxu0 0.0
    %334 = vmatpush1.msra.mxu0 0.0
    %335 = vmatprep.subr.mxu0 0.0
    %336 = vmatpush1.msra.mxu0 0.0
    %337 = vmatprep.subr.mxu0 0.0
    %338 = vmatpush1.msra.mxu0 0.0
    %339 = vmatprep.subr.mxu0 0.0
    %340 = vmatpush1.msra.mxu0 0.0
    %341 = vmatprep.subr.mxu0 0.0
    %342 = vmatpush1.msra.mxu0 0.0
    %343 = vmatprep.subr.mxu0 0.0
    %344 = vmatpush1.msra.mxu0 0.0
    %345 = vmatprep.subr.mxu0 0.0
    %346 = vmatpush1.msra.mxu0 0.0
    %347 = vmatprep.mubr.f32.mxu0 0.0
    %348 = vmatmul.mubr.f32.gmra.mrb[0].mxu0 %v281
    %v349 = vpop.f32.mrb[0].mxu0
    %v350 = vadd.f32 0.0, %v349
    %v351 = vpop.f32.mrb[0].mxu0
    %352 = vdwg.mxu0
    %v354 = vsel %vm133, %v56, 0
    %356 = vmatprep.subr.mxu0 0.0
    %357 = vmatpush1.msra.mxu0 %v81
    %358 = vmatprep.subr.mxu0 0.0
    %359 = vmatpush1.msra.mxu0 %v82
    %360 = vmatprep.subr.mxu0 0.0
    %361 = vmatpush1.msra.mxu0 %v83
    %362 = vmatprep.subr.mxu0 0.0
    %363 = vmatpush1.msra.mxu0 %v84
    %364 = vmatprep.subr.mxu0 0.0
    %365 = vmatpush1.msra.mxu0 0.0
    %366 = vmatprep.subr.mxu0 0.0
    %367 = vmatpush1.msra.mxu0 0.0
    %368 = vmatprep.subr.mxu0 0.0
    %369 = vmatpush1.msra.mxu0 0.0
    %370 = vmatprep.subr.mxu0 0.0
    %371 = vmatpush1.msra.mxu0 0.0
    %372 = vmatprep.subr.mxu0 0.0
    %373 = vmatpush1.msra.mxu0 0.0
    %374 = vmatprep.subr.mxu0 0.0
    %375 = vmatpush1.msra.mxu0 0.0
    %376 = vmatprep.subr.mxu0 0.0
    %377 = vmatpush1.msra.mxu0 0.0
    %378 = vmatprep.subr.mxu0 0.0
    %379 = vmatpush1.msra.mxu0 0.0
    %380 = vmatprep.subr.mxu0 0.0
    %381 = vmatpush1.msra.mxu0 0.0
    %382 = vmatprep.subr.mxu0 0.0
    %383 = vmatpush1.msra.mxu0 0.0
    %384 = vmatprep.subr.mxu0 0.0
    %385 = vmatpush1.msra.mxu0 0.0
    %386 = vmatprep.subr.mxu0 0.0
    %387 = vmatpush1.msra.mxu0 0.0
    %388 = vmatprep.subr.mxu0 0.0
    %389 = vmatpush1.msra.mxu0 0.0
    %390 = vmatprep.subr.mxu0 0.0
    %391 = vmatpush1.msra.mxu0 0.0
    %392 = vmatprep.subr.mxu0 0.0
    %393 = vmatpush1.msra.mxu0 0.0
    %394 = vmatprep.subr.mxu0 0.0
    %395 = vmatpush1.msra.mxu0 0.0
    %396 = vmatprep.subr.mxu0 0.0
    %397 = vmatpush1.msra.mxu0 0.0
    %398 = vmatprep.subr.mxu0 0.0
    %399 = vmatpush1.msra.mxu0 0.0
    %400 = vmatprep.subr.mxu0 0.0
    %401 = vmatpush1.msra.mxu0 0.0
    %402 = vmatprep.subr.mxu0 0.0
    %403 = vmatpush1.msra.mxu0 0.0
    %404 = vmatprep.subr.mxu0 0.0
    %405 = vmatpush1.msra.mxu0 0.0
    %406 = vmatprep.subr.mxu0 0.0
    %407 = vmatpush1.msra.mxu0 0.0
    %408 = vmatprep.subr.mxu0 0.0
    %409 = vmatpush1.msra.mxu0 0.0
    %410 = vmatprep.subr.mxu0 0.0
    %411 = vmatpush1.msra.mxu0 0.0
    %412 = vmatprep.subr.mxu0 0.0
    %413 = vmatpush1.msra.mxu0 0.0
    %414 = vmatprep.subr.mxu0 0.0
    %415 = vmatpush1.msra.mxu0 0.0
    %416 = vmatprep.subr.mxu0 0.0
    %417 = vmatpush1.msra.mxu0 0.0
    %418 = vmatprep.subr.mxu0 0.0
    %419 = vmatpush1.msra.mxu0 0.0
    %420 = vmatprep.mubr.f32.mxu0 0.0
    %421 = vmatmul.mubr.f32.gmra.mrb[0].mxu0 %v354
    %v422 = vpop.f32.mrb[0].mxu0
    %v423 = vadd.f32 0.0, %v422
    %v424 = vpop.f32.mrb[0].mxu0
    %425 = vdwg.mxu0
    %v427 = vsel %vm133, %v57, 0
    %429 = vmatprep.subr.mxu0 0.0
    %430 = vmatpush1.msra.mxu0 %v85
    %431 = vmatprep.subr.mxu0 0.0
    %432 = vmatpush1.msra.mxu0 %v86
    %433 = vmatprep.subr.mxu0 0.0
    %434 = vmatpush1.msra.mxu0 %v87
    %435 = vmatprep.subr.mxu0 0.0
    %436 = vmatpush1.msra.mxu0 %v88
    %437 = vmatprep.subr.mxu0 0.0
    %438 = vmatpush1.msra.mxu0 0.0
    %439 = vmatprep.subr.mxu0 0.0
    %440 = vmatpush1.msra.mxu0 0.0
    %441 = vmatprep.subr.mxu0 0.0
    %442 = vmatpush1.msra.mxu0 0.0
    %443 = vmatprep.subr.mxu0 0.0
    %444 = vmatpush1.msra.mxu0 0.0
    %445 = vmatprep.subr.mxu0 0.0
    %446 = vmatpush1.msra.mxu0 0.0
    %447 = vmatprep.subr.mxu0 0.0
    %448 = vmatpush1.msra.mxu0 0.0
    %449 = vmatprep.subr.mxu0 0.0
    %450 = vmatpush1.msra.mxu0 0.0
    %451 = vmatprep.subr.mxu0 0.0
    %452 = vmatpush1.msra.mxu0 0.0
    %453 = vmatprep.subr.mxu0 0.0
    %454 = vmatpush1.msra.mxu0 0.0
    %455 = vmatprep.subr.mxu0 0.0
    %456 = vmatpush1.msra.mxu0 0.0
    %457 = vmatprep.subr.mxu0 0.0
    %458 = vmatpush1.msra.mxu0 0.0
    %459 = vmatprep.subr.mxu0 0.0
    %460 = vmatpush1.msra.mxu0 0.0
    %461 = vmatprep.subr.mxu0 0.0
    %462 = vmatpush1.msra.mxu0 0.0
    %463 = vmatprep.subr.mxu0 0.0
    %464 = vmatpush1.msra.mxu0 0.0
    %465 = vmatprep.subr.mxu0 0.0
    %466 = vmatpush1.msra.mxu0 0.0
    %467 = vmatprep.subr.mxu0 0.0
    %468 = vmatpush1.msra.mxu0 0.0
    %469 = vmatprep.subr.mxu0 0.0
    %470 = vmatpush1.msra.mxu0 0.0
    %471 = vmatprep.subr.mxu0 0.0
    %472 = vmatpush1.msra.mxu0 0.0
    %473 = vmatprep.subr.mxu0 0.0
    %474 = vmatpush1.msra.mxu0 0.0
    %475 = vmatprep.subr.mxu0 0.0
    %476 = vmatpush1.msra.mxu0 0.0
    %477 = vmatprep.subr.mxu0 0.0
    %478 = vmatpush1.msra.mxu0 0.0
    %479 = vmatprep.subr.mxu0 0.0
    %480 = vmatpush1.msra.mxu0 0.0
    %481 = vmatprep.subr.mxu0 0.0
    %482 = vmatpush1.msra.mxu0 0.0
    %483 = vmatprep.subr.mxu0 0.0
    %484 = vmatpush1.msra.mxu0 0.0
    %485 = vmatprep.subr.mxu0 0.0
    %486 = vmatpush1.msra.mxu0 0.0
    %487 = vmatprep.subr.mxu0 0.0
    %488 = vmatpush1.msra.mxu0 0.0
    %489 = vmatprep.subr.mxu0 0.0
    %490 = vmatpush1.msra.mxu0 0.0
    %491 = vmatprep.subr.mxu0 0.0
    %492 = vmatpush1.msra.mxu0 0.0
    %493 = vmatprep.mubr.f32.mxu0 0.0
    %494 = vmatmul.mubr.f32.gmra.mrb[0].mxu0 %v427
    %v495 = vpop.f32.mrb[0].mxu0
    %v496 = vadd.f32 0.0, %v495
    %v497 = vpop.f32.mrb[0].mxu0
    %498 = vdwg.mxu0
    %v500 = vsel %vm133, %v58, 0
    %502 = vmatprep.subr.mxu0 0.0
    %503 = vmatpush1.msra.mxu0 %v89
    %504 = vmatprep.subr.mxu0 0.0
    %505 = vmatpush1.msra.mxu0 %v90
    %506 = vmatprep.subr.mxu0 0.0
    %507 = vmatpush1.msra.mxu0 %v91
    %508 = vmatprep.subr.mxu0 0.0
    %509 = vmatpush1.msra.mxu0 %v92
    %510 = vmatprep.subr.mxu0 0.0
    %511 = vmatpush1.msra.mxu0 0.0
    %512 = vmatprep.subr.mxu0 0.0
    %513 = vmatpush1.msra.mxu0 0.0
    %514 = vmatprep.subr.mxu0 0.0
    %515 = vmatpush1.msra.mxu0 0.0
    %516 = vmatprep.subr.mxu0 0.0
    %517 = vmatpush1.msra.mxu0 0.0
    %518 = vmatprep.subr.mxu0 0.0
    %519 = vmatpush1.msra.mxu0 0.0
    %520 = vmatprep.subr.mxu0 0.0
    %521 = vmatpush1.msra.mxu0 0.0
    %522 = vmatprep.subr.mxu0 0.0
    %523 = vmatpush1.msra.mxu0 0.0
    %524 = vmatprep.subr.mxu0 0.0
    %525 = vmatpush1.msra.mxu0 0.0
    %526 = vmatprep.subr.mxu0 0.0
    %527 = vmatpush1.msra.mxu0 0.0
    %528 = vmatprep.subr.mxu0 0.0
    %529 = vmatpush1.msra.mxu0 0.0
    %530 = vmatprep.subr.mxu0 0.0
    %531 = vmatpush1.msra.mxu0 0.0
    %532 = vmatprep.subr.mxu0 0.0
    %533 = vmatpush1.msra.mxu0 0.0
    %534 = vmatprep.subr.mxu0 0.0
    %535 = vmatpush1.msra.mxu0 0.0
    %536 = vmatprep.subr.mxu0 0.0
    %537 = vmatpush1.msra.mxu0 0.0
    %538 = vmatprep.subr.mxu0 0.0
    %539 = vmatpush1.msra.mxu0 0.0
    %540 = vmatprep.subr.mxu0 0.0
    %541 = vmatpush1.msra.mxu0 0.0
    %542 = vmatprep.subr.mxu0 0.0
    %543 = vmatpush1.msra.mxu0 0.0
    %544 = vmatprep.subr.mxu0 0.0
    %545 = vmatpush1.msra.mxu0 0.0
    %546 = vmatprep.subr.mxu0 0.0
    %547 = vmatpush1.msra.mxu0 0.0
    %548 = vmatprep.subr.mxu0 0.0
    %549 = vmatpush1.msra.mxu0 0.0
    %550 = vmatprep.subr.mxu0 0.0
    %551 = vmatpush1.msra.mxu0 0.0
    %552 = vmatprep.subr.mxu0 0.0
    %553 = vmatpush1.msra.mxu0 0.0
    %554 = vmatprep.subr.mxu0 0.0
    %555 = vmatpush1.msra.mxu0 0.0
    %556 = vmatprep.subr.mxu0 0.0
    %557 = vmatpush1.msra.mxu0 0.0
    %558 = vmatprep.subr.mxu0 0.0
    %559 = vmatpush1.msra.mxu0 0.0
    %560 = vmatprep.subr.mxu0 0.0
    %561 = vmatpush1.msra.mxu0 0.0
    %562 = vmatprep.subr.mxu0 0.0
    %563 = vmatpush1.msra.mxu0 0.0
    %564 = vmatprep.subr.mxu0 0.0
    %565 = vmatpush1.msra.mxu0 0.0
    %566 = vmatprep.mubr.f32.mxu0 0.0
    %567 = vmatmul.mubr.f32.gmra.mrb[0].mxu0 %v500
    %v568 = vpop.f32.mrb[0].mxu0
    %v569 = vadd.f32 0.0, %v568
    %v570 = vpop.f32.mrb[0].mxu0
    %571 = vdwg.mxu0
    %v573 = vsel %vm133, %v59, 0
    %575 = vmatprep.subr.mxu0 0.0
    %576 = vmatpush1.msra.mxu0 %v93
    %577 = vmatprep.subr.mxu0 0.0
    %578 = vmatpush1.msra.mxu0 %v94
    %579 = vmatprep.subr.mxu0 0.0
    %580 = vmatpush1.msra.mxu0 %v95
    %581 = vmatprep.subr.mxu0 0.0
    %582 = vmatpush1.msra.mxu0 %v96
    %583 = vmatprep.subr.mxu0 0.0
    %584 = vmatpush1.msra.mxu0 0.0
    %585 = vmatprep.subr.mxu0 0.0
    %586 = vmatpush1.msra.mxu0 0.0
    %587 = vmatprep.subr.mxu0 0.0
    %588 = vmatpush1.msra.mxu0 0.0
    %589 = vmatprep.subr.mxu0 0.0
    %590 = vmatpush1.msra.mxu0 0.0
    %591 = vmatprep.subr.mxu0 0.0
    %592 = vmatpush1.msra.mxu0 0.0
    %593 = vmatprep.subr.mxu0 0.0
    %594 = vmatpush1.msra.mxu0 0.0
    %595 = vmatprep.subr.mxu0 0.0
    %596 = vmatpush1.msra.mxu0 0.0
    %597 = vmatprep.subr.mxu0 0.0
    %598 = vmatpush1.msra.mxu0 0.0
    %599 = vmatprep.subr.mxu0 0.0
    %600 = vmatpush1.msra.mxu0 0.0
    %601 = vmatprep.subr.mxu0 0.0
    %602 = vmatpush1.msra.mxu0 0.0
    %603 = vmatprep.subr.mxu0 0.0
    %604 = vmatpush1.msra.mxu0 0.0
    %605 = vmatprep.subr.mxu0 0.0
    %606 = vmatpush1.msra.mxu0 0.0
    %607 = vmatprep.subr.mxu0 0.0
    %608 = vmatpush1.msra.mxu0 0.0
    %609 = vmatprep.subr.mxu0 0.0
    %610 = vmatpush1.msra.mxu0 0.0
    %611 = vmatprep.subr.mxu0 0.0
    %612 = vmatpush1.msra.mxu0 0.0
    %613 = vmatprep.subr.mxu0 0.0
    %614 = vmatpush1.msra.mxu0 0.0
    %615 = vmatprep.subr.mxu0 0.0
    %616 = vmatpush1.msra.mxu0 0.0
    %617 = vmatprep.subr.mxu0 0.0
    %618 = vmatpush1.msra.mxu0 0.0
    %619 = vmatprep.subr.mxu0 0.0
    %620 = vmatpush1.msra.mxu0 0.0
    %621 = vmatprep.subr.mxu0 0.0
    %622 = vmatpush1.msra.mxu0 0.0
    %623 = vmatprep.subr.mxu0 0.0
    %624 = vmatpush1.msra.mxu0 0.0
    %625 = vmatprep.subr.mxu0 0.0
    %626 = vmatpush1.msra.mxu0 0.0
    %627 = vmatprep.subr.mxu0 0.0
    %628 = vmatpush1.msra.mxu0 0.0
    %629 = vmatprep.subr.mxu0 0.0
    %630 = vmatpush1.msra.mxu0 0.0
    %631 = vmatprep.subr.mxu0 0.0
    %632 = vmatpush1.msra.mxu0 0.0
    %633 = vmatprep.subr.mxu0 0.0
    %634 = vmatpush1.msra.mxu0 0.0
    %635 = vmatprep.subr.mxu0 0.0
    %636 = vmatpush1.msra.mxu0 0.0
    %637 = vmatprep.subr.mxu0 0.0
    %638 = vmatpush1.msra.mxu0 0.0
    %639 = vmatprep.mubr.f32.mxu0 0.0
    %640 = vmatmul.mubr.f32.gmra.mrb[0].mxu0 %v573
    %v641 = vpop.f32.mrb[0].mxu0
    %v642 = vadd.f32 0.0, %v641
    %v643 = vpop.f32.mrb[0].mxu0
    %644 = vdwg.mxu0
    %v646 = vsel %vm133, %v60, 0
    %648 = vmatprep.subr.mxu0 0.0
    %649 = vmatpush1.msra.mxu0 %v97
    %650 = vmatprep.subr.mxu0 0.0
    %651 = vmatpush1.msra.mxu0 %v98
    %652 = vmatprep.subr.mxu0 0.0
    %653 = vmatpush1.msra.mxu0 %v99
    %654 = vmatprep.subr.mxu0 0.0
    %655 = vmatpush1.msra.mxu0 %v100
    %656 = vmatprep.subr.mxu0 0.0
    %657 = vmatpush1.msra.mxu0 0.0
    %658 = vmatprep.subr.mxu0 0.0
    %659 = vmatpush1.msra.mxu0 0.0
    %660 = vmatprep.subr.mxu0 0.0
    %661 = vmatpush1.msra.mxu0 0.0
    %662 = vmatprep.subr.mxu0 0.0
    %663 = vmatpush1.msra.mxu0 0.0
    %664 = vmatprep.subr.mxu0 0.0
    %665 = vmatpush1.msra.mxu0 0.0
    %666 = vmatprep.subr.mxu0 0.0
    %667 = vmatpush1.msra.mxu0 0.0
    %668 = vmatprep.subr.mxu0 0.0
    %669 = vmatpush1.msra.mxu0 0.0
    %670 = vmatprep.subr.mxu0 0.0
    %671 = vmatpush1.msra.mxu0 0.0
    %672 = vmatprep.subr.mxu0 0.0
    %673 = vmatpush1.msra.mxu0 0.0
    %674 = vmatprep.subr.mxu0 0.0
    %675 = vmatpush1.msra.mxu0 0.0
    %676 = vmatprep.subr.mxu0 0.0
    %677 = vmatpush1.msra.mxu0 0.0
    %678 = vmatprep.subr.mxu0 0.0
    %679 = vmatpush1.msra.mxu0 0.0
    %680 = vmatprep.subr.mxu0 0.0
    %681 = vmatpush1.msra.mxu0 0.0
    %682 = vmatprep.subr.mxu0 0.0
    %683 = vmatpush1.msra.mxu0 0.0
    %684 = vmatprep.subr.mxu0 0.0
    %685 = vmatpush1.msra.mxu0 0.0
    %686 = vmatprep.subr.mxu0 0.0
    %687 = vmatpush1.msra.mxu0 0.0
    %688 = vmatprep.subr.mxu0 0.0
    %689 = vmatpush1.msra.mxu0 0.0
    %690 = vmatprep.subr.mxu0 0.0
    %691 = vmatpush1.msra.mxu0 0.0
    %692 = vmatprep.subr.mxu0 0.0
    %693 = vmatpush1.msra.mxu0 0.0
    %694 = vmatprep.subr.mxu0 0.0
    %695 = vmatpush1.msra.mxu0 0.0
    %696 = vmatprep.subr.mxu0 0.0
    %697 = vmatpush1.msra.mxu0 0.0
    %698 = vmatprep.subr.mxu0 0.0
    %699 = vmatpush1.msra.mxu0 0.0
    %700 = vmatprep.subr.mxu0 0.0
    %701 = vmatpush1.msra.mxu0 0.0
    %702 = vmatprep.subr.mxu0 0.0
    %703 = vmatpush1.msra.mxu0 0.0
    %704 = vmatprep.subr.mxu0 0.0
    %705 = vmatpush1.msra.mxu0 0.0
    %706 = vmatprep.subr.mxu0 0.0
    %707 = vmatpush1.msra.mxu0 0.0
    %708 = vmatprep.subr.mxu0 0.0
    %709 = vmatpush1.msra.mxu0 0.0
    %710 = vmatprep.subr.mxu0 0.0
    %711 = vmatpush1.msra.mxu0 0.0
    %712 = vmatprep.mubr.f32.mxu0 0.0
    %713 = vmatmul.mubr.f32.gmra.mrb[0].mxu0 %v646
    %v714 = vpop.f32.mrb[0].mxu0
    %v715 = vadd.f32 0.0, %v714
    %v716 = vpop.f32.mrb[0].mxu0
    %717 = vdwg.mxu0
    %v719 = vsel %vm133, %v61, 0
    %721 = vmatprep.subr.mxu0 0.0
    %722 = vmatpush1.msra.mxu0 %v101
    %723 = vmatprep.subr.mxu0 0.0
    %724 = vmatpush1.msra.mxu0 %v102
    %725 = vmatprep.subr.mxu0 0.0
    %726 = vmatpush1.msra.mxu0 %v103
    %727 = vmatprep.subr.mxu0 0.0
    %728 = vmatpush1.msra.mxu0 %v104
    %729 = vmatprep.subr.mxu0 0.0
    %730 = vmatpush1.msra.mxu0 0.0
    %731 = vmatprep.subr.mxu0 0.0
    %732 = vmatpush1.msra.mxu0 0.0
    %733 = vmatprep.subr.mxu0 0.0
    %734 = vmatpush1.msra.mxu0 0.0
    %735 = vmatprep.subr.mxu0 0.0
    %736 = vmatpush1.msra.mxu0 0.0
    %737 = vmatprep.subr.mxu0 0.0
    %738 = vmatpush1.msra.mxu0 0.0
    %739 = vmatprep.subr.mxu0 0.0
    %740 = vmatpush1.msra.mxu0 0.0
    %741 = vmatprep.subr.mxu0 0.0
    %742 = vmatpush1.msra.mxu0 0.0
    %743 = vmatprep.subr.mxu0 0.0
    %744 = vmatpush1.msra.mxu0 0.0
    %745 = vmatprep.subr.mxu0 0.0
    %746 = vmatpush1.msra.mxu0 0.0
    %747 = vmatprep.subr.mxu0 0.0
    %748 = vmatpush1.msra.mxu0 0.0
    %749 = vmatprep.subr.mxu0 0.0
    %750 = vmatpush1.msra.mxu0 0.0
    %751 = vmatprep.subr.mxu0 0.0
    %752 = vmatpush1.msra.mxu0 0.0
    %753 = vmatprep.subr.mxu0 0.0
    %754 = vmatpush1.msra.mxu0 0.0
    %755 = vmatprep.subr.mxu0 0.0
    %756 = vmatpush1.msra.mxu0 0.0
    %757 = vmatprep.subr.mxu0 0.0
    %758 = vmatpush1.msra.mxu0 0.0
    %759 = vmatprep.subr.mxu0 0.0
    %760 = vmatpush1.msra.mxu0 0.0
    %761 = vmatprep.subr.mxu0 0.0
    %762 = vmatpush1.msra.mxu0 0.0
    %763 = vmatprep.subr.mxu0 0.0
    %764 = vmatpush1.msra.mxu0 0.0
    %765 = vmatprep.subr.mxu0 0.0
    %766 = vmatpush1.msra.mxu0 0.0
    %767 = vmatprep.subr.mxu0 0.0
    %768 = vmatpush1.msra.mxu0 0.0
    %769 = vmatprep.subr.mxu0 0.0
    %770 = vmatpush1.msra.mxu0 0.0
    %771 = vmatprep.subr.mxu0 0.0
    %772 = vmatpush1.msra.mxu0 0.0
    %773 = vmatprep.subr.mxu0 0.0
    %774 = vmatpush1.msra.mxu0 0.0
    %775 = vmatprep.subr.mxu0 0.0
    %776 = vmatpush1.msra.mxu0 0.0
    %777 = vmatprep.subr.mxu0 0.0
    %778 = vmatpush1.msra.mxu0 0.0
    %779 = vmatprep.subr.mxu0 0.0
    %780 = vmatpush1.msra.mxu0 0.0
    %781 = vmatprep.subr.mxu0 0.0
    %782 = vmatpush1.msra.mxu0 0.0
    %783 = vmatprep.subr.mxu0 0.0
    %784 = vmatpush1.msra.mxu0 0.0
    %785 = vmatprep.mubr.f32.mxu0 0.0
    %786 = vmatmul.mubr.f32.gmra.mrb[0].mxu0 %v719
    %v787 = vpop.f32.mrb[0].mxu0
    %v788 = vadd.f32 0.0, %v787
    %v789 = vpop.f32.mrb[0].mxu0
    %790 = vdwg.mxu0
    %v792 = vsel %vm133, %v62, 0
    %794 = vmatprep.subr.mxu0 0.0
    %795 = vmatpush1.msra.mxu0 %v105
    %796 = vmatprep.subr.mxu0 0.0
    %797 = vmatpush1.msra.mxu0 %v106
    %798 = vmatprep.subr.mxu0 0.0
    %799 = vmatpush1.msra.mxu0 %v107
    %800 = vmatprep.subr.mxu0 0.0
    %801 = vmatpush1.msra.mxu0 %v108
    %802 = vmatprep.subr.mxu0 0.0
    %803 = vmatpush1.msra.mxu0 0.0
    %804 = vmatprep.subr.mxu0 0.0
    %805 = vmatpush1.msra.mxu0 0.0
    %806 = vmatprep.subr.mxu0 0.0
    %807 = vmatpush1.msra.mxu0 0.0
    %808 = vmatprep.subr.mxu0 0.0
    %809 = vmatpush1.msra.mxu0 0.0
    %810 = vmatprep.subr.mxu0 0.0
    %811 = vmatpush1.msra.mxu0 0.0
    %812 = vmatprep.subr.mxu0 0.0
    %813 = vmatpush1.msra.mxu0 0.0
    %814 = vmatprep.subr.mxu0 0.0
    %815 = vmatpush1.msra.mxu0 0.0
    %816 = vmatprep.subr.mxu0 0.0
    %817 = vmatpush1.msra.mxu0 0.0
    %818 = vmatprep.subr.mxu0 0.0
    %819 = vmatpush1.msra.mxu0 0.0
    %820 = vmatprep.subr.mxu0 0.0
    %821 = vmatpush1.msra.mxu0 0.0
    %822 = vmatprep.subr.mxu0 0.0
    %823 = vmatpush1.msra.mxu0 0.0
    %824 = vmatprep.subr.mxu0 0.0
    %825 = vmatpush1.msra.mxu0 0.0
    %826 = vmatprep.subr.mxu0 0.0
    %827 = vmatpush1.msra.mxu0 0.0
    %828 = vmatprep.subr.mxu0 0.0
    %829 = vmatpush1.msra.mxu0 0.0
    %830 = vmatprep.subr.mxu0 0.0
    %831 = vmatpush1.msra.mxu0 0.0
    %832 = vmatprep.subr.mxu0 0.0
    %833 = vmatpush1.msra.mxu0 0.0
    %834 = vmatprep.subr.mxu0 0.0
    %835 = vmatpush1.msra.mxu0 0.0
    %836 = vmatprep.subr.mxu0 0.0
    %837 = vmatpush1.msra.mxu0 0.0
    %838 = vmatprep.subr.mxu0 0.0
    %839 = vmatpush1.msra.mxu0 0.0
    %840 = vmatprep.subr.mxu0 0.0
    %841 = vmatpush1.msra.mxu0 0.0
    %842 = vmatprep.subr.mxu0 0.0
    %843 = vmatpush1.msra.mxu0 0.0
    %844 = vmatprep.subr.mxu0 0.0
    %845 = vmatpush1.msra.mxu0 0.0
    %846 = vmatprep.subr.mxu0 0.0
    %847 = vmatpush1.msra.mxu0 0.0
    %848 = vmatprep.subr.mxu0 0.0
    %849 = vmatpush1.msra.mxu0 0.0
    %850 = vmatprep.subr.mxu0 0.0
    %851 = vmatpush1.msra.mxu0 0.0
    %852 = vmatprep.subr.mxu0 0.0
    %853 = vmatpush1.msra.mxu0 0.0
    %854 = vmatprep.subr.mxu0 0.0
    %855 = vmatpush1.msra.mxu0 0.0
    %856 = vmatprep.subr.mxu0 0.0
    %857 = vmatpush1.msra.mxu0 0.0
    %858 = vmatprep.mubr.f32.mxu0 0.0
    %859 = vmatmul.mubr.f32.gmra.mrb[0].mxu0 %v792
    %v860 = vpop.f32.mrb[0].mxu0
    %v861 = vadd.f32 0.0, %v860
    %v862 = vpop.f32.mrb[0].mxu0
    %863 = vdwg.mxu0
    %v865 = vsel %vm133, %v63, 0
    %867 = vmatprep.subr.mxu0 0.0
    %868 = vmatpush1.msra.mxu0 %v109
    %869 = vmatprep.subr.mxu0 0.0
    %870 = vmatpush1.msra.mxu0 %v110
    %871 = vmatprep.subr.mxu0 0.0
    %872 = vmatpush1.msra.mxu0 %v111
    %873 = vmatprep.subr.mxu0 0.0
    %874 = vmatpush1.msra.mxu0 %v112
    %875 = vmatprep.subr.mxu0 0.0
    %876 = vmatpush1.msra.mxu0 0.0
    %877 = vmatprep.subr.mxu0 0.0
    %878 = vmatpush1.msra.mxu0 0.0
    %879 = vmatprep.subr.mxu0 0.0
    %880 = vmatpush1.msra.mxu0 0.0
    %881 = vmatprep.subr.mxu0 0.0
    %882 = vmatpush1.msra.mxu0 0.0
    %883 = vmatprep.subr.mxu0 0.0
    %884 = vmatpush1.msra.mxu0 0.0
    %885 = vmatprep.subr.mxu0 0.0
    %886 = vmatpush1.msra.mxu0 0.0
    %887 = vmatprep.subr.mxu0 0.0
    %888 = vmatpush1.msra.mxu0 0.0
    %889 = vmatprep.subr.mxu0 0.0
    %890 = vmatpush1.msra.mxu0 0.0
    %891 = vmatprep.subr.mxu0 0.0
    %892 = vmatpush1.msra.mxu0 0.0
    %893 = vmatprep.subr.mxu0 0.0
    %894 = vmatpush1.msra.mxu0 0.0
    %895 = vmatprep.subr.mxu0 0.0
    %896 = vmatpush1.msra.mxu0 0.0
    %897 = vmatprep.subr.mxu0 0.0
    %898 = vmatpush1.msra.mxu0 0.0
    %899 = vmatprep.subr.mxu0 0.0
    %900 = vmatpush1.msra.mxu0 0.0
    %901 = vmatprep.subr.mxu0 0.0
    %902 = vmatpush1.msra.mxu0 0.0
    %903 = vmatprep.subr.mxu0 0.0
    %904 = vmatpush1.msra.mxu0 0.0
    %905 = vmatprep.subr.mxu0 0.0
    %906 = vmatpush1.msra.mxu0 0.0
    %907 = vmatprep.subr.mxu0 0.0
    %908 = vmatpush1.msra.mxu0 0.0
    %909 = vmatprep.subr.mxu0 0.0
    %910 = vmatpush1.msra.mxu0 0.0
    %911 = vmatprep.subr.mxu0 0.0
    %912 = vmatpush1.msra.mxu0 0.0
    %913 = vmatprep.subr.mxu0 0.0
    %914 = vmatpush1.msra.mxu0 0.0
    %915 = vmatprep.subr.mxu0 0.0
    %916 = vmatpush1.msra.mxu0 0.0
    %917 = vmatprep.subr.mxu0 0.0
    %918 = vmatpush1.msra.mxu0 0.0
    %919 = vmatprep.subr.mxu0 0.0
    %920 = vmatpush1.msra.mxu0 0.0
    %921 = vmatprep.subr.mxu0 0.0
    %922 = vmatpush1.msra.mxu0 0.0
    %923 = vmatprep.subr.mxu0 0.0
    %924 = vmatpush1.msra.mxu0 0.0
    %925 = vmatprep.subr.mxu0 0.0
    %926 = vmatpush1.msra.mxu0 0.0
    %927 = vmatprep.subr.mxu0 0.0
    %928 = vmatpush1.msra.mxu0 0.0
    %929 = vmatprep.subr.mxu0 0.0
    %930 = vmatpush1.msra.mxu0 0.0
    %931 = vmatprep.mubr.f32.mxu0 0.0
    %932 = vmatmul.mubr.f32.gmra.mrb[0].mxu0 %v865
    %v933 = vpop.f32.mrb[0].mxu0
    %v934 = vadd.f32 0.0, %v933
    %v935 = vpop.f32.mrb[0].mxu0
    %936 = vdwg.mxu0
    %v938 = vsel %vm133, %v64, 0
    %940 = vmatprep.subr.mxu0 0.0
    %941 = vmatpush1.msra.mxu0 %v113
    %942 = vmatprep.subr.mxu0 0.0
    %943 = vmatpush1.msra.mxu0 %v114
    %944 = vmatprep.subr.mxu0 0.0
    %945 = vmatpush1.msra.mxu0 %v115
    %946 = vmatprep.subr.mxu0 0.0
    %947 = vmatpush1.msra.mxu0 %v116
    %948 = vmatprep.subr.mxu0 0.0
    %949 = vmatpush1.msra.mxu0 0.0
    %950 = vmatprep.subr.mxu0 0.0
    %951 = vmatpush1.msra.mxu0 0.0
    %952 = vmatprep.subr.mxu0 0.0
    %953 = vmatpush1.msra.mxu0 0.0
    %954 = vmatprep.subr.mxu0 0.0
    %955 = vmatpush1.msra.mxu0 0.0
    %956 = vmatprep.subr.mxu0 0.0
    %957 = vmatpush1.msra.mxu0 0.0
    %958 = vmatprep.subr.mxu0 0.0
    %959 = vmatpush1.msra.mxu0 0.0
    %960 = vmatprep.subr.mxu0 0.0
    %961 = vmatpush1.msra.mxu0 0.0
    %962 = vmatprep.subr.mxu0 0.0
    %963 = vmatpush1.msra.mxu0 0.0
    %964 = vmatprep.subr.mxu0 0.0
    %965 = vmatpush1.msra.mxu0 0.0
    %966 = vmatprep.subr.mxu0 0.0
    %967 = vmatpush1.msra.mxu0 0.0
    %968 = vmatprep.subr.mxu0 0.0
    %969 = vmatpush1.msra.mxu0 0.0
    %970 = vmatprep.subr.mxu0 0.0
    %971 = vmatpush1.msra.mxu0 0.0
    %972 = vmatprep.subr.mxu0 0.0
    %973 = vmatpush1.msra.mxu0 0.0
    %974 = vmatprep.subr.mxu0 0.0
    %975 = vmatpush1.msra.mxu0 0.0
    %976 = vmatprep.subr.mxu0 0.0
    %977 = vmatpush1.msra.mxu0 0.0
    %978 = vmatprep.subr.mxu0 0.0
    %979 = vmatpush1.msra.mxu0 0.0
    %980 = vmatprep.subr.mxu0 0.0
    %981 = vmatpush1.msra.mxu0 0.0
    %982 = vmatprep.subr.mxu0 0.0
    %983 = vmatpush1.msra.mxu0 0.0
    %984 = vmatprep.subr.mxu0 0.0
    %985 = vmatpush1.msra.mxu0 0.0
    %986 = vmatprep.subr.mxu0 0.0
    %987 = vmatpush1.msra.mxu0 0.0
    %988 = vmatprep.subr.mxu0 0.0
    %989 = vmatpush1.msra.mxu0 0.0
    %990 = vmatprep.subr.mxu0 0.0
    %991 = vmatpush1.msra.mxu0 0.0
    %992 = vmatprep.subr.mxu0 0.0
    %993 = vmatpush1.msra.mxu0 0.0
    %994 = vmatprep.subr.mxu0 0.0
    %995 = vmatpush1.msra.mxu0 0.0
    %996 = vmatprep.subr.mxu0 0.0
    %997 = vmatpush1.msra.mxu0 0.0
    %998 = vmatprep.subr.mxu0 0.0
    %999 = vmatpush1.msra.mxu0 0.0
    %1000 = vmatprep.subr.mxu0 0.0
    %1001 = vmatpush1.msra.mxu0 0.0
    %1002 = vmatprep.subr.mxu0 0.0
    %1003 = vmatpush1.msra.mxu0 0.0
    %1004 = vmatprep.mubr.f32.mxu0 0.0
    %1005 = vmatmul.mubr.f32.gmra.mrb[0].mxu0 %v938
    %v1006 = vpop.f32.mrb[0].mxu0
    %v1007 = vadd.f32 0.0, %v1006
    %v1008 = vpop.f32.mrb[0].mxu0
    %1009 = vdwg.mxu0
    %v1011 = vsel %vm133, %v65, 0
    %1013 = vmatprep.subr.mxu0 0.0
    %1014 = vmatpush1.msra.mxu0 %v117
    %1015 = vmatprep.subr.mxu0 0.0
    %1016 = vmatpush1.msra.mxu0 %v118
    %1017 = vmatprep.subr.mxu0 0.0
    %1018 = vmatpush1.msra.mxu0 %v119
    %1019 = vmatprep.subr.mxu0 0.0
    %1020 = vmatpush1.msra.mxu0 %v120
    %1021 = vmatprep.subr.mxu0 0.0
    %1022 = vmatpush1.msra.mxu0 0.0
    %1023 = vmatprep.subr.mxu0 0.0
    %1024 = vmatpush1.msra.mxu0 0.0
    %1025 = vmatprep.subr.mxu0 0.0
    %1026 = vmatpush1.msra.mxu0 0.0
    %1027 = vmatprep.subr.mxu0 0.0
    %1028 = vmatpush1.msra.mxu0 0.0
    %1029 = vmatprep.subr.mxu0 0.0
    %1030 = vmatpush1.msra.mxu0 0.0
    %1031 = vmatprep.subr.mxu0 0.0
    %1032 = vmatpush1.msra.mxu0 0.0
    %1033 = vmatprep.subr.mxu0 0.0
    %1034 = vmatpush1.msra.mxu0 0.0
    %1035 = vmatprep.subr.mxu0 0.0
    %1036 = vmatpush1.msra.mxu0 0.0
    %1037 = vmatprep.subr.mxu0 0.0
    %1038 = vmatpush1.msra.mxu0 0.0
    %1039 = vmatprep.subr.mxu0 0.0
    %1040 = vmatpush1.msra.mxu0 0.0
    %1041 = vmatprep.subr.mxu0 0.0
    %1042 = vmatpush1.msra.mxu0 0.0
    %1043 = vmatprep.subr.mxu0 0.0
    %1044 = vmatpush1.msra.mxu0 0.0
    %1045 = vmatprep.subr.mxu0 0.0
    %1046 = vmatpush1.msra.mxu0 0.0
    %1047 = vmatprep.subr.mxu0 0.0
    %1048 = vmatpush1.msra.mxu0 0.0
    %1049 = vmatprep.subr.mxu0 0.0
    %1050 = vmatpush1.msra.mxu0 0.0
    %1051 = vmatprep.subr.mxu0 0.0
    %1052 = vmatpush1.msra.mxu0 0.0
    %1053 = vmatprep.subr.mxu0 0.0
    %1054 = vmatpush1.msra.mxu0 0.0
    %1055 = vmatprep.subr.mxu0 0.0
    %1056 = vmatpush1.msra.mxu0 0.0
    %1057 = vmatprep.subr.mxu0 0.0
    %1058 = vmatpush1.msra.mxu0 0.0
    %1059 = vmatprep.subr.mxu0 0.0
    %1060 = vmatpush1.msra.mxu0 0.0
    %1061 = vmatprep.subr.mxu0 0.0
    %1062 = vmatpush1.msra.mxu0 0.0
    %1063 = vmatprep.subr.mxu0 0.0
    %1064 = vmatpush1.msra.mxu0 0.0
    %1065 = vmatprep.subr.mxu0 0.0
    %1066 = vmatpush1.msra.mxu0 0.0
    %1067 = vmatprep.subr.mxu0 0.0
    %1068 = vmatpush1.msra.mxu0 0.0
    %1069 = vmatprep.subr.mxu0 0.0
    %1070 = vmatpush1.msra.mxu0 0.0
    %1071 = vmatprep.subr.mxu0 0.0
    %1072 = vmatpush1.msra.mxu0 0.0
    %1073 = vmatprep.subr.mxu0 0.0
    %1074 = vmatpush1.msra.mxu0 0.0
    %1075 = vmatprep.subr.mxu0 0.0
    %1076 = vmatpush1.msra.mxu0 0.0
    %1077 = vmatprep.mubr.f32.mxu0 0.0
    %1078 = vmatmul.mubr.f32.gmra.mrb[0].mxu0 %v1011
    %v1079 = vpop.f32.mrb[0].mxu0
    %v1080 = vadd.f32 0.0, %v1079
    %v1081 = vpop.f32.mrb[0].mxu0
    %1082 = vdwg.mxu0
    %v1084 = vsel %vm133, %v66, 0
    %1086 = vmatprep.subr.mxu0 0.0
    %1087 = vmatpush1.msra.mxu0 %v121
    %1088 = vmatprep.subr.mxu0 0.0
    %1089 = vmatpush1.msra.mxu0 %v122
    %1090 = vmatprep.subr.mxu0 0.0
    %1091 = vmatpush1.msra.mxu0 %v123
    %1092 = vmatprep.subr.mxu0 0.0
    %1093 = vmatpush1.msra.mxu0 %v124
    %1094 = vmatprep.subr.mxu0 0.0
    %1095 = vmatpush1.msra.mxu0 0.0
    %1096 = vmatprep.subr.mxu0 0.0
    %1097 = vmatpush1.msra.mxu0 0.0
    %1098 = vmatprep.subr.mxu0 0.0
    %1099 = vmatpush1.msra.mxu0 0.0
    %1100 = vmatprep.subr.mxu0 0.0
    %1101 = vmatpush1.msra.mxu0 0.0
    %1102 = vmatprep.subr.mxu0 0.0
    %1103 = vmatpush1.msra.mxu0 0.0
    %1104 = vmatprep.subr.mxu0 0.0
    %1105 = vmatpush1.msra.mxu0 0.0
    %1106 = vmatprep.subr.mxu0 0.0
    %1107 = vmatpush1.msra.mxu0 0.0
    %1108 = vmatprep.subr.mxu0 0.0
    %1109 = vmatpush1.msra.mxu0 0.0
    %1110 = vmatprep.subr.mxu0 0.0
    %1111 = vmatpush1.msra.mxu0 0.0
    %1112 = vmatprep.subr.mxu0 0.0
    %1113 = vmatpush1.msra.mxu0 0.0
    %1114 = vmatprep.subr.mxu0 0.0
    %1115 = vmatpush1.msra.mxu0 0.0
    %1116 = vmatprep.subr.mxu0 0.0
    %1117 = vmatpush1.msra.mxu0 0.0
    %1118 = vmatprep.subr.mxu0 0.0
    %1119 = vmatpush1.msra.mxu0 0.0
    %1120 = vmatprep.subr.mxu0 0.0
    %1121 = vmatpush1.msra.mxu0 0.0
    %1122 = vmatprep.subr.mxu0 0.0
    %1123 = vmatpush1.msra.mxu0 0.0
    %1124 = vmatprep.subr.mxu0 0.0
    %1125 = vmatpush1.msra.mxu0 0.0
    %1126 = vmatprep.subr.mxu0 0.0
    %1127 = vmatpush1.msra.mxu0 0.0
    %1128 = vmatprep.subr.mxu0 0.0
    %1129 = vmatpush1.msra.mxu0 0.0
    %1130 = vmatprep.subr.mxu0 0.0
    %1131 = vmatpush1.msra.mxu0 0.0
    %1132 = vmatprep.subr.mxu0 0.0
    %1133 = vmatpush1.msra.mxu0 0.0
    %1134 = vmatprep.subr.mxu0 0.0
    %1135 = vmatpush1.msra.mxu0 0.0
    %1136 = vmatprep.subr.mxu0 0.0
    %1137 = vmatpush1.msra.mxu0 0.0
    %1138 = vmatprep.subr.mxu0 0.0
    %1139 = vmatpush1.msra.mxu0 0.0
    %1140 = vmatprep.subr.mxu0 0.0
    %1141 = vmatpush1.msra.mxu0 0.0
    %1142 = vmatprep.subr.mxu0 0.0
    %1143 = vmatpush1.msra.mxu0 0.0
    %1144 = vmatprep.subr.mxu0 0.0
    %1145 = vmatpush1.msra.mxu0 0.0
    %1146 = vmatprep.subr.mxu0 0.0
    %1147 = vmatpush1.msra.mxu0 0.0
    %1148 = vmatprep.subr.mxu0 0.0
    %1149 = vmatpush1.msra.mxu0 0.0
    %1150 = vmatprep.mubr.f32.mxu0 0.0
    %1151 = vmatmul.mubr.f32.gmra.mrb[0].mxu0 %v1084
    %v1152 = vpop.f32.mrb[0].mxu0
    %v1153 = vadd.f32 0.0, %v1152
    %v1154 = vpop.f32.mrb[0].mxu0
    %1155 = vdwg.mxu0
    %v1157 = vsel %vm133, %v67, 0
    %1159 = vmatprep.subr.mxu0 0.0
    %1160 = vmatpush1.msra.mxu0 %v125
    %1161 = vmatprep.subr.mxu0 0.0
    %1162 = vmatpush1.msra.mxu0 %v126
    %1163 = vmatprep.subr.mxu0 0.0
    %1164 = vmatpush1.msra.mxu0 %v127
    %1165 = vmatprep.subr.mxu0 0.0
    %1166 = vmatpush1.msra.mxu0 %v128
    %1167 = vmatprep.subr.mxu0 0.0
    %1168 = vmatpush1.msra.mxu0 0.0
    %1169 = vmatprep.subr.mxu0 0.0
    %1170 = vmatpush1.msra.mxu0 0.0
    %1171 = vmatprep.subr.mxu0 0.0
    %1172 = vmatpush1.msra.mxu0 0.0
    %1173 = vmatprep.subr.mxu0 0.0
    %1174 = vmatpush1.msra.mxu0 0.0
    %1175 = vmatprep.subr.mxu0 0.0
    %1176 = vmatpush1.msra.mxu0 0.0
    %1177 = vmatprep.subr.mxu0 0.0
    %1178 = vmatpush1.msra.mxu0 0.0
    %1179 = vmatprep.subr.mxu0 0.0
    %1180 = vmatpush1.msra.mxu0 0.0
    %1181 = vmatprep.subr.mxu0 0.0
    %1182 = vmatpush1.msra.mxu0 0.0
    %1183 = vmatprep.subr.mxu0 0.0
    %1184 = vmatpush1.msra.mxu0 0.0
    %1185 = vmatprep.subr.mxu0 0.0
    %1186 = vmatpush1.msra.mxu0 0.0
    %1187 = vmatprep.subr.mxu0 0.0
    %1188 = vmatpush1.msra.mxu0 0.0
    %1189 = vmatprep.subr.mxu0 0.0
    %1190 = vmatpush1.msra.mxu0 0.0
    %1191 = vmatprep.subr.mxu0 0.0
    %1192 = vmatpush1.msra.mxu0 0.0
    %1193 = vmatprep.subr.mxu0 0.0
    %1194 = vmatpush1.msra.mxu0 0.0
    %1195 = vmatprep.subr.mxu0 0.0
    %1196 = vmatpush1.msra.mxu0 0.0
    %1197 = vmatprep.subr.mxu0 0.0
    %1198 = vmatpush1.msra.mxu0 0.0
    %1199 = vmatprep.subr.mxu0 0.0
    %1200 = vmatpush1.msra.mxu0 0.0
    %1201 = vmatprep.subr.mxu0 0.0
    %1202 = vmatpush1.msra.mxu0 0.0
    %1203 = vmatprep.subr.mxu0 0.0
    %1204 = vmatpush1.msra.mxu0 0.0
    %1205 = vmatprep.subr.mxu0 0.0
    %1206 = vmatpush1.msra.mxu0 0.0
    %1207 = vmatprep.subr.mxu0 0.0
    %1208 = vmatpush1.msra.mxu0 0.0
    %1209 = vmatprep.subr.mxu0 0.0
    %1210 = vmatpush1.msra.mxu0 0.0
    %1211 = vmatprep.subr.mxu0 0.0
    %1212 = vmatpush1.msra.mxu0 0.0
    %1213 = vmatprep.subr.mxu0 0.0
    %1214 = vmatpush1.msra.mxu0 0.0
    %1215 = vmatprep.subr.mxu0 0.0
    %1216 = vmatpush1.msra.mxu0 0.0
    %1217 = vmatprep.subr.mxu0 0.0
    %1218 = vmatpush1.msra.mxu0 0.0
    %1219 = vmatprep.subr.mxu0 0.0
    %1220 = vmatpush1.msra.mxu0 0.0
    %1221 = vmatprep.subr.mxu0 0.0
    %1222 = vmatpush1.msra.mxu0 0.0
    %1223 = vmatprep.mubr.f32.mxu0 0.0
    %1224 = vmatmul.mubr.f32.gmra.mrb[0].mxu0 %v1157
    %v1225 = vpop.f32.mrb[0].mxu0
    %v1226 = vadd.f32 0.0, %v1225
    %v1227 = vpop.f32.mrb[0].mxu0
    %1228 = vdwg.mxu0
    %v1230 = vsel %vm133, %v68, 0
    %1232 = vmatprep.subr.mxu0 0.0
    %1233 = vmatpush1.msra.mxu0 %v129
    %1234 = vmatprep.subr.mxu0 0.0
    %1235 = vmatpush1.msra.mxu0 %v130
    %1236 = vmatprep.subr.mxu0 0.0
    %1237 = vmatpush1.msra.mxu0 %v131
    %1238 = vmatprep.subr.mxu0 0.0
    %1239 = vmatpush1.msra.mxu0 %v132
    %1240 = vmatprep.subr.mxu0 0.0
    %1241 = vmatpush1.msra.mxu0 0.0
    %1242 = vmatprep.subr.mxu0 0.0
    %1243 = vmatpush1.msra.mxu0 0.0
    %1244 = vmatprep.subr.mxu0 0.0
    %1245 = vmatpush1.msra.mxu0 0.0
    %1246 = vmatprep.subr.mxu0 0.0
    %1247 = vmatpush1.msra.mxu0 0.0
    %1248 = vmatprep.subr.mxu0 0.0
    %1249 = vmatpush1.msra.mxu0 0.0
    %1250 = vmatprep.subr.mxu0 0.0
    %1251 = vmatpush1.msra.mxu0 0.0
    %1252 = vmatprep.subr.mxu0 0.0
    %1253 = vmatpush1.msra.mxu0 0.0
    %1254 = vmatprep.subr.mxu0 0.0
    %1255 = vmatpush1.msra.mxu0 0.0
    %1256 = vmatprep.subr.mxu0 0.0
    %1257 = vmatpush1.msra.mxu0 0.0
    %1258 = vmatprep.subr.mxu0 0.0
    %1259 = vmatpush1.msra.mxu0 0.0
    %1260 = vmatprep.subr.mxu0 0.0
    %1261 = vmatpush1.msra.mxu0 0.0
    %1262 = vmatprep.subr.mxu0 0.0
    %1263 = vmatpush1.msra.mxu0 0.0
    %1264 = vmatprep.subr.mxu0 0.0
    %1265 = vmatpush1.msra.mxu0 0.0
    %1266 = vmatprep.subr.mxu0 0.0
    %1267 = vmatpush1.msra.mxu0 0.0
    %1268 = vmatprep.subr.mxu0 0.0
    %1269 = vmatpush1.msra.mxu0 0.0
    %1270 = vmatprep.subr.mxu0 0.0
    %1271 = vmatpush1.msra.mxu0 0.0
    %1272 = vmatprep.subr.mxu0 0.0
    %1273 = vmatpush1.msra.mxu0 0.0
    %1274 = vmatprep.subr.mxu0 0.0
    %1275 = vmatpush1.msra.mxu0 0.0
    %1276 = vmatprep.subr.mxu0 0.0
    %1277 = vmatpush1.msra.mxu0 0.0
    %1278 = vmatprep.subr.mxu0 0.0
    %1279 = vmatpush1.msra.mxu0 0.0
    %1280 = vmatprep.subr.mxu0 0.0
    %1281 = vmatpush1.msra.mxu0 0.0
    %1282 = vmatprep.subr.mxu0 0.0
    %1283 = vmatpush1.msra.mxu0 0.0
    %1284 = vmatprep.subr.mxu0 0.0
    %1285 = vmatpush1.msra.mxu0 0.0
    %1286 = vmatprep.subr.mxu0 0.0
    %1287 = vmatpush1.msra.mxu0 0.0
    %1288 = vmatprep.subr.mxu0 0.0
    %1289 = vmatpush1.msra.mxu0 0.0
    %1290 = vmatprep.subr.mxu0 0.0
    %1291 = vmatpush1.msra.mxu0 0.0
    %1292 = vmatprep.subr.mxu0 0.0
    %1293 = vmatpush1.msra.mxu0 0.0
    %1294 = vmatprep.subr.mxu0 0.0
    %1295 = vmatpush1.msra.mxu0 0.0
    %1296 = vmatprep.mubr.f32.mxu0 0.0
    %1297 = vmatmul.mubr.f32.gmra.mrb[0].mxu0 %v1230
    %v1298 = vpop.f32.mrb[0].mxu0
    %v1299 = vadd.f32 0.0, %v1298
    %v1300 = vpop.f32.mrb[0].mxu0
    %1301 = vdwg.mxu0
    %v1302 = vadd.f32 %v37, %v204
    %v1303 = vadd.f32 %v38, %v277
    %v1304 = vadd.f32 %v39, %v350
    %v1305 = vadd.f32 %v40, %v423
    %v1306 = vadd.f32 %v41, %v496
    %v1307 = vadd.f32 %v42, %v569
    %v1308 = vadd.f32 %v43, %v642
    %v1309 = vadd.f32 %v44, %v715
    %v1310 = vadd.f32 %v45, %v788
    %v1311 = vadd.f32 %v46, %v861
    %v1312 = vadd.f32 %v47, %v934
    %v1313 = vadd.f32 %v48, %v1007
    %v1314 = vadd.f32 %v49, %v1080
    %v1315 = vadd.f32 %v50, %v1153
    %v1316 = vadd.f32 %v51, %v1226
    %v1317 = vadd.f32 %v52, %v1299
    %vm1318 = vcmask 64512
    %1319 = vst.msk [vmem:[#allocation2] sm:$0xff] %vm1318, %v1302
    %1320 = vst.msk [vmem:[#allocation2 + $0x8] sm:$0xff] %vm1318, %v1303
    %1321 = vst.msk [vmem:[#allocation2 + $0x10] sm:$0xff] %vm1318, %v1304
    %1322 = vst.msk [vmem:[#allocation2 + $0x18] sm:$0xff] %vm1318, %v1305
    %1323 = vst.msk [vmem:[#allocation2 + $0x20] sm:$0xff] %vm1318, %v1306
    %1324 = vst.msk [vmem:[#allocation2 + $0x28] sm:$0xff] %vm1318, %v1307
    %1325 = vst.msk [vmem:[#allocation2 + $0x30] sm:$0xff] %vm1318, %v1308
    %1326 = vst.msk [vmem:[#allocation2 + $0x38] sm:$0xff] %vm1318, %v1309
    %1327 = vst.msk [vmem:[#allocation2 + $0x40] sm:$0xff] %vm1318, %v1310
    %1328 = vst.msk [vmem:[#allocation2 + $0x48] sm:$0xff] %vm1318, %v1311
    %1329 = vst.msk [vmem:[#allocation2 + $0x50] sm:$0xff] %vm1318, %v1312
    %1330 = vst.msk [vmem:[#allocation2 + $0x58] sm:$0xff] %vm1318, %v1313
    %1331 = vst.msk [vmem:[#allocation2 + $0x60] sm:$0xff] %vm1318, %v1314
    %1332 = vst.msk [vmem:[#allocation2 + $0x68] sm:$0xff] %vm1318, %v1315
    %1333 = vst.msk [vmem:[#allocation2 + $0x70] sm:$0xff] %vm1318, %v1316
    %1334 = vst.msk [vmem:[#allocation2 + $0x78] sm:$0xff] %vm1318, %v1317
    // Predicated region
    $region18: #{tpu_custom_call.1} parent=1 // pred_check
      %p1335 = pneg %p16
    $region19: #{tpu_custom_call.1} parent=1 // pred_check_branch
      %1337 = sbr.rel (%p1335) target = $region21
    $region20: #{tpu_custom_call.1} parent=1 // pred_region
      %v1338 = vld [vmem:[#allocation2] sm:$0xff]
      %v1339 = vld [vmem:[#allocation2 + $0x8] sm:$0xff]
      %v1340 = vld [vmem:[#allocation2 + $0x10] sm:$0xff]
      %v1341 = vld [vmem:[#allocation2 + $0x18] sm:$0xff]
      %v1342 = vld [vmem:[#allocation2 + $0x20] sm:$0xff]
      %v1343 = vld [vmem:[#allocation2 + $0x28] sm:$0xff]
      %v1344 = vld [vmem:[#allocation2 + $0x30] sm:$0xff]
      %v1345 = vld [vmem:[#allocation2 + $0x38] sm:$0xff]
      %v1346 = vld [vmem:[#allocation2 + $0x40] sm:$0xff]
      %v1347 = vld [vmem:[#allocation2 + $0x48] sm:$0xff]
      %v1348 = vld [vmem:[#allocation2 + $0x50] sm:$0xff]
      %v1349 = vld [vmem:[#allocation2 + $0x58] sm:$0xff]
      %v1350 = vld [vmem:[#allocation2 + $0x60] sm:$0xff]
      %v1351 = vld [vmem:[#allocation2 + $0x68] sm:$0xff]
      %v1352 = vld [vmem:[#allocation2 + $0x70] sm:$0xff]
      %v1353 = vld [vmem:[#allocation2 + $0x78] sm:$0xff]
      %1354 = vst.msk [vmem:[#allocation4] sm:$0xff] %vm1318, %v1338
      %1356 = vrot.lane.b32.xlu0 %v1339, 8
      %v1357 = vpop.permute.xlu0 %1356
      %vm1359 = vcmask 130112
      %1360 = vst.msk [vmem:[#allocation4] sm:$0xff] %vm1359, %v1357
      %1362 = vrot.lane.b32.xlu0 %v1340, 16
      %v1363 = vpop.permute.xlu0 %1362
      %vm1365 = vcmask 195712
      %1366 = vst.msk [vmem:[#allocation4] sm:$0xff] %vm1365, %v1363
      %1368 = vrot.lane.b32.xlu0 %v1341, 24
      %v1369 = vpop.permute.xlu0 %1368
      %vm1371 = vcmask 261312
      %1372 = vst.msk [vmem:[#allocation4] sm:$0xff] %vm1371, %v1369
      %1374 = vrot.lane.b32.xlu0 %v1342, 32
      %v1375 = vpop.permute.xlu0 %1374
      %vm1377 = vcmask 326912
      %1378 = vst.msk [vmem:[#allocation4] sm:$0xff] %vm1377, %v1375
      %1380 = vrot.lane.b32.xlu0 %v1343, 40
      %v1381 = vpop.permute.xlu0 %1380
      %vm1383 = vcmask 392512
      %1384 = vst.msk [vmem:[#allocation4] sm:$0xff] %vm1383, %v1381
      %1386 = vrot.lane.b32.xlu0 %v1344, 48
      %v1387 = vpop.permute.xlu0 %1386
      %vm1389 = vcmask 458112
      %1390 = vst.msk [vmem:[#allocation4] sm:$0xff] %vm1389, %v1387
      %1392 = vrot.lane.b32.xlu0 %v1345, 56
      %v1393 = vpop.permute.xlu0 %1392
      %vm1395 = vcmask 523712
      %1396 = vst.msk [vmem:[#allocation4] sm:$0xff] %vm1395, %v1393
      %1398 = vrot.lane.b32.xlu0 %v1346, 64
      %v1399 = vpop.permute.xlu0 %1398
      %vm1401 = vcmask 589312
      %1402 = vst.msk [vmem:[#allocation4] sm:$0xff] %vm1401, %v1399
      %1404 = vrot.lane.b32.xlu0 %v1347, 72
      %v1405 = vpop.permute.xlu0 %1404
      %vm1407 = vcmask 654912
      %1408 = vst.msk [vmem:[#allocation4] sm:$0xff] %vm1407, %v1405
      %1410 = vrot.lane.b32.xlu0 %v1348, 80
      %v1411 = vpop.permute.xlu0 %1410
      %vm1413 = vcmask 720512
      %1414 = vst.msk [vmem:[#allocation4] sm:$0xff] %vm1413, %v1411
      %1416 = vrot.lane.b32.xlu0 %v1349, 88
      %v1417 = vpop.permute.xlu0 %1416
      %vm1419 = vcmask 786112
      %1420 = vst.msk [vmem:[#allocation4] sm:$0xff] %vm1419, %v1417
      %1422 = vrot.lane.b32.xlu0 %v1350, 96
      %v1423 = vpop.permute.xlu0 %1422
      %vm1425 = vcmask 851712
      %1426 = vst.msk [vmem:[#allocation4] sm:$0xff] %vm1425, %v1423
      %1428 = vrot.lane.b32.xlu0 %v1351, 104
      %v1429 = vpop.permute.xlu0 %1428
      %vm1431 = vcmask 917312
      %1432 = vst.msk [vmem:[#allocation4] sm:$0xff] %vm1431, %v1429
      %1434 = vrot.lane.b32.xlu0 %v1352, 112
      %v1435 = vpop.permute.xlu0 %1434
      %vm1437 = vcmask 982912
      %1438 = vst.msk [vmem:[#allocation4] sm:$0xff] %vm1437, %v1435
      %1440 = vrot.lane.b32.xlu0 %v1353, 120
      %v1441 = vpop.permute.xlu0 %1440
      %vm1443 = vcmask 1048512
      %1444 = vst.msk [vmem:[#allocation4] sm:$0xff] %vm1443, %v1441
    $region21: #{tpu_custom_call.1} parent=1 // pred_fallthru
      _
    // Predicated region
    $region22: #{tpu_custom_call.1} parent=1 // pred_check
      _
    $region23: #{tpu_custom_call.1} parent=1 // pred_check_branch
      %1446 = sbr.rel (0) target = $region25
    $region24: #{tpu_custom_call.1} parent=1 // pred_region
      %s1448 = ssub.s32 128, 128
      %1449 = vsyncadd [#allocation5], %s1448
      %s1451 = sshll.u32 [#allocation4], 4
      %s1452 = int_to_ptr.vmem [resolvable:$true] %s1451
      %1454 = dma.vmem_to_hbm [thread:$0]  %s1452, 128, %s3, [#allocation5]
    $region25: #{tpu_custom_call.1} parent=1 // pred_fallthru
      _
    // Predicated region
    $region26: #{tpu_custom_call.1} parent=1 // pred_check
      _
    $region27: #{tpu_custom_call.1} parent=1 // pred_check_branch
      %1456 = sbr.rel (0) target = $region29
    $region28: #{tpu_custom_call.1} parent=1 // pred_region
      %1457 = dma.done [#allocation5], 128
    $region29: #{tpu_custom_call.1} parent=1 // pred_fallthru
      _
    %1458 = vsyncpa [#allocation5], 1

</llo_original>
